<compile_context>
chip_gen: v7x
topology: tpu7x:2x2x1
jax: 0.10.0
libtpu: 0.0.40
codegen_flags: <defaults>
</compile_context>

<pallas_src>
import functools

import jax
import jax.numpy as jnp
from jax.experimental import pallas as pl
from jax.experimental.pallas import tpu as pltpu


def _round_up(x, m):
    return ((x + m - 1) // m) * m


def _sgc_kernel(x_ref, w_ref, b_ref, at_ref, o_ref, ysc_ref, *,
                K, T_tile, Vp, Cout):
    """One (batch n, time-tile tb) block.

    x_ref  : (1, T_tile, Vp, Cin)       activations, channels-last, V zero-padded
    w_ref  : (Cin, K*Cout)              fused 1x1-conv weight (all K kernels)
    b_ref  : (1, K*Cout)  f32           conv bias
    at_ref : (K, Wp, Vp)                A transposed per spatial kernel (padded)
    o_ref  : (1, 1, Wp, T_tile*Cout)    output tile, lanes = (t_local, c)
    ysc_ref: (K, Vp, T_tile*Cout)       VMEM scratch: y re-tiled for stage 2
    """
    Cin = x_ref.shape[-1]

    # ---- Stage 1: fused 1x1 conv. One big MXU matmul: contraction = Cin,
    # lanes = K*Cout.  Bias added here (padded graph nodes are later killed by
    # A's zero columns, so the bias-on-zero-rows is harmless).
    x2 = x_ref[0].reshape(T_tile * Vp, Cin)                          # rows = (t, v)
    y = jnp.dot(x2, w_ref[...], preferred_element_type=jnp.float32)  # (T*Vp, K*Cout)
    y = (y + b_ref[...]).astype(ysc_ref.dtype)

    # ---- Stage 2: graph contraction as K big matmuls.  For each k, y is
    # re-tiled through VMEM scratch to (Vp, T_tile*Cout) with static, aligned
    # slice stores, then the whole time tile streams through the MXU at once.
    acc = None
    for k in range(K):
        for t in range(T_tile):
            ysc_ref[k, :, t * Cout:(t + 1) * Cout] = (
                y[t * Vp:(t + 1) * Vp, k * Cout:(k + 1) * Cout])
        d = jnp.dot(at_ref[k], ysc_ref[k],
                    preferred_element_type=jnp.float32)              # (Wp, T*Cout)
        acc = d if acc is None else acc + d

    # Single lane-dense store of the whole tile.
    o_ref[0, 0] = acc.astype(o_ref.dtype)


def _vmem_bytes_estimate(t_tile, Vp, Wp, Cin, Cout, K, in_bytes, out_bytes):
    x_blk = 2 * t_tile * Vp * Cin * in_bytes            # double-buffered input tile
    w = 2 * Cin * K * Cout * in_bytes
    at = 2 * K * Wp * Vp * in_bytes
    bias = 2 * K * Cout * 4
    o_blk = 2 * Wp * t_tile * Cout * out_bytes          # double-buffered output tile
    ysc = K * Vp * t_tile * Cout * in_bytes             # scratch
    y_tmp = 2 * t_tile * Vp * K * Cout * 4              # stage-1 f32 temp + cast copy
    return x_blk + w + at + bias + o_blk + ysc + y_tmp


def _pick_t_tile(T, Vp, Wp, Cin, Cout, K, in_bytes, out_bytes,
                 max_tile=32, vmem_budget=20 * 1024 * 1024):
    """Largest multiple-of-8 T tile <= max_tile that fits the VMEM budget,
    preferring tiles that minimise T padding."""
    cap = min(max_tile, _round_up(T, 8))
    cands = [c for c in range(cap, 0, -8)
             if _vmem_bytes_estimate(c, Vp, Wp, Cin, Cout, K,
                                     in_bytes, out_bytes) <= vmem_budget]
    if not cands:
        cands = [8]
    return min(cands, key=lambda c: (_round_up(T, c) - T, -c))


def spatial_graph_conv(x, A, conv_w, conv_b, s_kernel_size, *,
                       compute_dtype=jnp.bfloat16, out_dtype=None, t_tile=None):
    """Forward pass of SpatialGraphConvolution.

    x: (N, Cin, T, V).  A: (K, V, W).  conv_w: (K*Cout, Cin, 1, 1).  conv_b: (K*Cout,).
    Returns (N, Cout, T, W).  compute_dtype feeds the MXU (accumulation stays f32);
    note the bf16 path rounds x / weights / A / the y intermediate once each.
    """
    N, Cin, T, V = x.shape
    K, _, W = A.shape
    assert K == s_kernel_size
    assert conv_w.shape[0] % K == 0
    Cout = conv_w.shape[0] // K
    cdt = jnp.dtype(compute_dtype)
    odt = jnp.dtype(x.dtype if out_dtype is None else out_dtype)

    Vp = _round_up(V, 8)
    Wp = _round_up(W, 8)
    in_bytes = cdt.itemsize
    out_bytes = odt.itemsize

    if t_tile is None:
        t_tile = _pick_t_tile(T, Vp, Wp, Cin, Cout, K, in_bytes, out_bytes)
    t_tile = max(8, _round_up(t_tile, 8))
    Tp = _round_up(T, t_tile)
    TB = Tp // t_tile

    # ---- wrapper-side layout plumbing (plain XLA, fuses into one copy) ----
    # TODO(synk): in a full ST-GCN keep activations channels-last (N, T, V, C)
    # between layers so these transposes / pads vanish from the e2e graph.
    x_k = jnp.transpose(x, (0, 2, 3, 1))                              # (N, T, V, Cin)
    x_k = jnp.pad(x_k, ((0, 0), (0, Tp - T), (0, Vp - V), (0, 0))).astype(cdt)
    w_all = conv_w[:, :, 0, 0].T.astype(cdt)                          # (Cin, K*Cout)
    bias = conv_b.reshape(1, K * Cout).astype(jnp.float32)
    a_p = jnp.pad(A, ((0, 0), (0, Vp - V), (0, Wp - W)))              # (K, Vp, Wp)
    a_t = jnp.transpose(a_p, (0, 2, 1)).astype(cdt)                   # (K, Wp, Vp)

    kernel = functools.partial(_sgc_kernel, K=K, T_tile=t_tile, Vp=Vp, Cout=Cout)

    vmem_limit = int(min(48 * 1024 * 1024,
                         max(16 * 1024 * 1024,
                             2 * _vmem_bytes_estimate(t_tile, Vp, Wp, Cin, Cout,
                                                      K, in_bytes, out_bytes))))

    out = pl.pallas_call(
        kernel,
        out_shape=jax.ShapeDtypeStruct((N, TB, Wp, t_tile * Cout), odt),
        grid_spec=pltpu.PrefetchScalarGridSpec(
            num_scalar_prefetch=0,
            grid=(N, TB),
            in_specs=[
                pl.BlockSpec((1, t_tile, Vp, Cin), lambda n, tb: (n, tb, 0, 0)),
                pl.BlockSpec((Cin, K * Cout), lambda n, tb: (0, 0)),
                pl.BlockSpec((1, K * Cout), lambda n, tb: (0, 0)),
                pl.BlockSpec((K, Wp, Vp), lambda n, tb: (0, 0, 0)),
            ],
            out_specs=pl.BlockSpec((1, 1, Wp, t_tile * Cout),
                                   lambda n, tb: (n, tb, 0, 0)),
            scratch_shapes=[pltpu.VMEM((K, Vp, t_tile * Cout), cdt)],
        ),
        compiler_params=pltpu.CompilerParams(
            dimension_semantics=("parallel", "parallel"),
            vmem_limit_bytes=vmem_limit),
    )(x_k, w_all, bias, a_t)

    # (N, TB, Wp, t_tile*Cout) -> (N, Cout, T, W)
    out = out.reshape(N, TB, Wp, t_tile, Cout)
    out = jnp.transpose(out, (0, 4, 1, 3, 2)).reshape(N, Cout, Tp, Wp)
    return out[:, :, :T, :W]


def _reference(x, A, conv_w, conv_b, K):
    """Plain-JAX transcription of the PyTorch forward (for verification)."""
    N, Cin, T, V = x.shape
    Cout = conv_w.shape[0] // K
    y = jnp.einsum('oc,nctv->notv', conv_w[:, :, 0, 0], x) \
        + conv_b[None, :, None, None]
    y = y.reshape(N, K, Cout, T, V)
    return jnp.einsum('nkctv,kvw->nctw', y, A)


if __name__ == "__main__":
    # Small but non-trivial shapes: V=10 exercises the V/W->16 padding path,
    # T=24 exercises T tiling, Cout=16 exercises sub-128 lane groups.
    N, Cin, Cout, K, T, V = 2, 8, 16, 3, 24, 10
    W = V

    key = jax.random.PRNGKey(0)
    kx, kw, kb, ka = jax.random.split(key, 4)
    x = jax.random.normal(kx, (N, Cin, T, V), dtype=jnp.float32)
    conv_w = jax.random.normal(kw, (K * Cout, Cin, 1, 1), dtype=jnp.float32) * 0.1
    conv_b = jax.random.normal(kb, (K * Cout,), dtype=jnp.float32) * 0.1
    A = jax.random.uniform(ka, (K, V, W), dtype=jnp.float32) / V

    ref = _reference(x, A, conv_w, conv_b, K)

    # Exact f32 path.
    out_f32 = jax.block_until_ready(
        spatial_graph_conv(x, A, conv_w, conv_b, K, compute_dtype=jnp.float32))
    assert out_f32.shape == (N, Cout, T, W), out_f32.shape
    assert jnp.allclose(out_f32, ref, rtol=1e-4, atol=1e-4), \
        float(jnp.max(jnp.abs(out_f32 - ref)))

    # Default bf16 MXU path (f32 accumulation), looser tolerance.
    out_bf = jax.block_until_ready(spatial_graph_conv(x, A, conv_w, conv_b, K))
    assert out_bf.shape == (N, Cout, T, W), out_bf.shape
    assert jnp.allclose(out_bf, ref, rtol=3e-2, atol=3e-2), \
        float(jnp.max(jnp.abs(out_bf - ref)))

    print("KERNEL_OK")
</pallas_src>

<mosaic_0001>
module attributes {stable_mosaic.version = 11 : i64} {
  func.func @_sgc_kernel(%arg0: i32, %arg1: i32, %arg2: memref<1x24x16x8xf32, #tpu.memory_space<vmem>>, %arg3: memref<8x48xf32, #tpu.memory_space<vmem>>, %arg4: memref<1x48xf32, #tpu.memory_space<vmem>>, %arg5: memref<3x16x16xf32, #tpu.memory_space<vmem>>, %arg6: memref<1x1x16x384xf32, #tpu.memory_space<vmem>>, %arg7: memref<3x16x384xf32, #tpu.memory_space<vmem>>) attributes {dimension_semantics = [#tpu.dimension_semantics<parallel>, #tpu.dimension_semantics<parallel>], iteration_bounds = array<i64: 2, 1>, scalar_prefetch = 0 : i64, scratch_operands = 1 : i64, tpu.core_type = #tpu.core_type<tc>, window_params = [{transform_indices = @transform_0, window_bounds = array<i64: 1, 24, 16, 8>}, {pipeline_mode = #tpu.pipeline_mode<synchronous>, transform_indices = @transform_1, window_bounds = array<i64: 8, 48>}, {pipeline_mode = #tpu.pipeline_mode<synchronous>, transform_indices = @transform_2, window_bounds = array<i64: 1, 48>}, {pipeline_mode = #tpu.pipeline_mode<synchronous>, transform_indices = @transform_3, window_bounds = array<i64: 3, 16, 16>}, {transform_indices = @transform_4, window_bounds = array<i64: 1, 1, 16, 384>}]} {
    %c0 = arith.constant 0 : index
    %c0_0 = arith.constant 0 : index
    %c0_1 = arith.constant 0 : index
    %c0_2 = arith.constant 0 : index
    %0 = vector.load %arg2[%c0, %c0_0, %c0_1, %c0_2] : memref<1x24x16x8xf32, #tpu.memory_space<vmem>>, vector<1x24x16x8xf32>
    %1 = vector.shape_cast %0 : vector<1x24x16x8xf32> to vector<24x16x8xf32>
    %2 = vector.shape_cast %1 : vector<24x16x8xf32> to vector<384x8xf32>
    %c0_3 = arith.constant 0 : index
    %c0_4 = arith.constant 0 : index
    %3 = vector.load %arg3[%c0_3, %c0_4] : memref<8x48xf32, #tpu.memory_space<vmem>>, vector<8x48xf32>
    %cst = arith.constant dense<0.000000e+00> : vector<384x48xf32>
    %4 = tpu.matmul %2, %3, %cst {dimension_numbers = #tpu.dot_dimension_numbers<[1], [0], [0], [1], [0, 0, 1, 1], [], []>} : vector<384x8xf32>, vector<8x48xf32>, vector<384x48xf32> -> vector<384x48xf32>
    %c0_5 = arith.constant 0 : index
    %c0_6 = arith.constant 0 : index
    %5 = vector.load %arg4[%c0_5, %c0_6] : memref<1x48xf32, #tpu.memory_space<vmem>>, vector<1x48xf32>
    %6 = vector.broadcast %5 : vector<1x48xf32> to vector<384x48xf32>
    %7 = arith.addf %4, %6 : vector<384x48xf32>
    %8 = vector.extract_strided_slice %7 {offsets = [0, 0], sizes = [16, 16], strides = [1, 1]} : vector<384x48xf32> to vector<16x16xf32>
    %c0_7 = arith.constant 0 : index
    %c0_8 = arith.constant 0 : index
    %c0_9 = arith.constant 0 : index
    %9 = vector.load %arg7[%c0_7, %c0_8, %c0_9] : memref<3x16x384xf32, #tpu.memory_space<vmem>>, vector<1x16x16xf32>
    %10 = vector.shape_cast %9 : vector<1x16x16xf32> to vector<16x16xf32>
    %11 = vector.shape_cast %8 : vector<16x16xf32> to vector<1x16x16xf32>
    tpu.vector_store %arg7[%c0_7, %c0_8, %c0_9], %11 {strides = array<i32>} : memref<3x16x384xf32, #tpu.memory_space<vmem>>, vector<1x16x16xf32>,
    %12 = vector.extract_strided_slice %7 {offsets = [16, 0], sizes = [16, 16], strides = [1, 1]} : vector<384x48xf32> to vector<16x16xf32>
    %c0_10 = arith.constant 0 : index
    %c0_11 = arith.constant 0 : index
    %c16 = arith.constant 16 : index
    %13 = vector.load %arg7[%c0_10, %c0_11, %c16] : memref<3x16x384xf32, #tpu.memory_space<vmem>>, vector<1x16x16xf32>
    %14 = vector.shape_cast %13 : vector<1x16x16xf32> to vector<16x16xf32>
    %15 = vector.shape_cast %12 : vector<16x16xf32> to vector<1x16x16xf32>
    tpu.vector_store %arg7[%c0_10, %c0_11, %c16], %15 {strides = array<i32>} : memref<3x16x384xf32, #tpu.memory_space<vmem>>, vector<1x16x16xf32>,
    %16 = vector.extract_strided_slice %7 {offsets = [32, 0], sizes = [16, 16], strides = [1, 1]} : vector<384x48xf32> to vector<16x16xf32>
    %c0_12 = arith.constant 0 : index
    %c0_13 = arith.constant 0 : index
    %c32 = arith.constant 32 : index
    %17 = vector.load %arg7[%c0_12, %c0_13, %c32] : memref<3x16x384xf32, #tpu.memory_space<vmem>>, vector<1x16x16xf32>
    %18 = vector.shape_cast %17 : vector<1x16x16xf32> to vector<16x16xf32>
    %19 = vector.shape_cast %16 : vector<16x16xf32> to vector<1x16x16xf32>
    tpu.vector_store %arg7[%c0_12, %c0_13, %c32], %19 {strides = array<i32>} : memref<3x16x384xf32, #tpu.memory_space<vmem>>, vector<1x16x16xf32>,
    %20 = vector.extract_strided_slice %7 {offsets = [48, 0], sizes = [16, 16], strides = [1, 1]} : vector<384x48xf32> to vector<16x16xf32>
    %c0_14 = arith.constant 0 : index
    %c0_15 = arith.constant 0 : index
    %c48 = arith.constant 48 : index
    %21 = vector.load %arg7[%c0_14, %c0_15, %c48] : memref<3x16x384xf32, #tpu.memory_space<vmem>>, vector<1x16x16xf32>
    %22 = vector.shape_cast %21 : vector<1x16x16xf32> to vector<16x16xf32>
    %23 = vector.shape_cast %20 : vector<16x16xf32> to vector<1x16x16xf32>
    tpu.vector_store %arg7[%c0_14, %c0_15, %c48], %23 {strides = array<i32>} : memref<3x16x384xf32, #tpu.memory_space<vmem>>, vector<1x16x16xf32>,
    %24 = vector.extract_strided_slice %7 {offsets = [64, 0], sizes = [16, 16], strides = [1, 1]} : vector<384x48xf32> to vector<16x16xf32>
    %c0_16 = arith.constant 0 : index
    %c0_17 = arith.constant 0 : index
    %c64 = arith.constant 64 : index
    %25 = vector.load %arg7[%c0_16, %c0_17, %c64] : memref<3x16x384xf32, #tpu.memory_space<vmem>>, vector<1x16x16xf32>
    %26 = vector.shape_cast %25 : vector<1x16x16xf32> to vector<16x16xf32>
    %27 = vector.shape_cast %24 : vector<16x16xf32> to vector<1x16x16xf32>
    tpu.vector_store %arg7[%c0_16, %c0_17, %c64], %27 {strides = array<i32>} : memref<3x16x384xf32, #tpu.memory_space<vmem>>, vector<1x16x16xf32>,
    %28 = vector.extract_strided_slice %7 {offsets = [80, 0], sizes = [16, 16], strides = [1, 1]} : vector<384x48xf32> to vector<16x16xf32>
    %c0_18 = arith.constant 0 : index
    %c0_19 = arith.constant 0 : index
    %c80 = arith.constant 80 : index
    %29 = vector.load %arg7[%c0_18, %c0_19, %c80] : memref<3x16x384xf32, #tpu.memory_space<vmem>>, vector<1x16x16xf32>
    %30 = vector.shape_cast %29 : vector<1x16x16xf32> to vector<16x16xf32>
    %31 = vector.shape_cast %28 : vector<16x16xf32> to vector<1x16x16xf32>
    tpu.vector_store %arg7[%c0_18, %c0_19, %c80], %31 {strides = array<i32>} : memref<3x16x384xf32, #tpu.memory_space<vmem>>, vector<1x16x16xf32>,
    %32 = vector.extract_strided_slice %7 {offsets = [96, 0], sizes = [16, 16], strides = [1, 1]} : vector<384x48xf32> to vector<16x16xf32>
    %c0_20 = arith.constant 0 : index
    %c0_21 = arith.constant 0 : index
    %c96 = arith.constant 96 : index
    %33 = vector.load %arg7[%c0_20, %c0_21, %c96] : memref<3x16x384xf32, #tpu.memory_space<vmem>>, vector<1x16x16xf32>
    %34 = vector.shape_cast %33 : vector<1x16x16xf32> to vector<16x16xf32>
    %35 = vector.shape_cast %32 : vector<16x16xf32> to vector<1x16x16xf32>
    tpu.vector_store %arg7[%c0_20, %c0_21, %c96], %35 {strides = array<i32>} : memref<3x16x384xf32, #tpu.memory_space<vmem>>, vector<1x16x16xf32>,
    %36 = vector.extract_strided_slice %7 {offsets = [112, 0], sizes = [16, 16], strides = [1, 1]} : vector<384x48xf32> to vector<16x16xf32>
    %c0_22 = arith.constant 0 : index
    %c0_23 = arith.constant 0 : index
    %c112 = arith.constant 112 : index
    %37 = vector.load %arg7[%c0_22, %c0_23, %c112] : memref<3x16x384xf32, #tpu.memory_space<vmem>>, vector<1x16x16xf32>
    %38 = vector.shape_cast %37 : vector<1x16x16xf32> to vector<16x16xf32>
    %39 = vector.shape_cast %36 : vector<16x16xf32> to vector<1x16x16xf32>
    tpu.vector_store %arg7[%c0_22, %c0_23, %c112], %39 {strides = array<i32>} : memref<3x16x384xf32, #tpu.memory_space<vmem>>, vector<1x16x16xf32>,
    %40 = vector.extract_strided_slice %7 {offsets = [128, 0], sizes = [16, 16], strides = [1, 1]} : vector<384x48xf32> to vector<16x16xf32>
    %c0_24 = arith.constant 0 : index
    %c0_25 = arith.constant 0 : index
    %c128 = arith.constant 128 : index
    %41 = vector.load %arg7[%c0_24, %c0_25, %c128] : memref<3x16x384xf32, #tpu.memory_space<vmem>>, vector<1x16x16xf32>
    %42 = vector.shape_cast %41 : vector<1x16x16xf32> to vector<16x16xf32>
    %43 = vector.shape_cast %40 : vector<16x16xf32> to vector<1x16x16xf32>
    tpu.vector_store %arg7[%c0_24, %c0_25, %c128], %43 {strides = array<i32>} : memref<3x16x384xf32, #tpu.memory_space<vmem>>, vector<1x16x16xf32>,
    %44 = vector.extract_strided_slice %7 {offsets = [144, 0], sizes = [16, 16], strides = [1, 1]} : vector<384x48xf32> to vector<16x16xf32>
    %c0_26 = arith.constant 0 : index
    %c0_27 = arith.constant 0 : index
    %c144 = arith.constant 144 : index
    %45 = vector.load %arg7[%c0_26, %c0_27, %c144] : memref<3x16x384xf32, #tpu.memory_space<vmem>>, vector<1x16x16xf32>
    %46 = vector.shape_cast %45 : vector<1x16x16xf32> to vector<16x16xf32>
    %47 = vector.shape_cast %44 : vector<16x16xf32> to vector<1x16x16xf32>
    tpu.vector_store %arg7[%c0_26, %c0_27, %c144], %47 {strides = array<i32>} : memref<3x16x384xf32, #tpu.memory_space<vmem>>, vector<1x16x16xf32>,
    %48 = vector.extract_strided_slice %7 {offsets = [160, 0], sizes = [16, 16], strides = [1, 1]} : vector<384x48xf32> to vector<16x16xf32>
    %c0_28 = arith.constant 0 : index
    %c0_29 = arith.constant 0 : index
    %c160 = arith.constant 160 : index
    %49 = vector.load %arg7[%c0_28, %c0_29, %c160] : memref<3x16x384xf32, #tpu.memory_space<vmem>>, vector<1x16x16xf32>
    %50 = vector.shape_cast %49 : vector<1x16x16xf32> to vector<16x16xf32>
    %51 = vector.shape_cast %48 : vector<16x16xf32> to vector<1x16x16xf32>
    tpu.vector_store %arg7[%c0_28, %c0_29, %c160], %51 {strides = array<i32>} : memref<3x16x384xf32, #tpu.memory_space<vmem>>, vector<1x16x16xf32>,
    %52 = vector.extract_strided_slice %7 {offsets = [176, 0], sizes = [16, 16], strides = [1, 1]} : vector<384x48xf32> to vector<16x16xf32>
    %c0_30 = arith.constant 0 : index
    %c0_31 = arith.constant 0 : index
    %c176 = arith.constant 176 : index
    %53 = vector.load %arg7[%c0_30, %c0_31, %c176] : memref<3x16x384xf32, #tpu.memory_space<vmem>>, vector<1x16x16xf32>
    %54 = vector.shape_cast %53 : vector<1x16x16xf32> to vector<16x16xf32>
    %55 = vector.shape_cast %52 : vector<16x16xf32> to vector<1x16x16xf32>
    tpu.vector_store %arg7[%c0_30, %c0_31, %c176], %55 {strides = array<i32>} : memref<3x16x384xf32, #tpu.memory_space<vmem>>, vector<1x16x16xf32>,
    %56 = vector.extract_strided_slice %7 {offsets = [192, 0], sizes = [16, 16], strides = [1, 1]} : vector<384x48xf32> to vector<16x16xf32>
    %c0_32 = arith.constant 0 : index
    %c0_33 = arith.constant 0 : index
    %c192 = arith.constant 192 : index
    %57 = vector.load %arg7[%c0_32, %c0_33, %c192] : memref<3x16x384xf32, #tpu.memory_space<vmem>>, vector<1x16x16xf32>
    %58 = vector.shape_cast %57 : vector<1x16x16xf32> to vector<16x16xf32>
    %59 = vector.shape_cast %56 : vector<16x16xf32> to vector<1x16x16xf32>
    tpu.vector_store %arg7[%c0_32, %c0_33, %c192], %59 {strides = array<i32>} : memref<3x16x384xf32, #tpu.memory_space<vmem>>, vector<1x16x16xf32>,
    %60 = vector.extract_strided_slice %7 {offsets = [208, 0], sizes = [16, 16], strides = [1, 1]} : vector<384x48xf32> to vector<16x16xf32>
    %c0_34 = arith.constant 0 : index
    %c0_35 = arith.constant 0 : index
    %c208 = arith.constant 208 : index
    %61 = vector.load %arg7[%c0_34, %c0_35, %c208] : memref<3x16x384xf32, #tpu.memory_space<vmem>>, vector<1x16x16xf32>
    %62 = vector.shape_cast %61 : vector<1x16x16xf32> to vector<16x16xf32>
    %63 = vector.shape_cast %60 : vector<16x16xf32> to vector<1x16x16xf32>
    tpu.vector_store %arg7[%c0_34, %c0_35, %c208], %63 {strides = array<i32>} : memref<3x16x384xf32, #tpu.memory_space<vmem>>, vector<1x16x16xf32>,
    %64 = vector.extract_strided_slice %7 {offsets = [224, 0], sizes = [16, 16], strides = [1, 1]} : vector<384x48xf32> to vector<16x16xf32>
    %c0_36 = arith.constant 0 : index
    %c0_37 = arith.constant 0 : index
    %c224 = arith.constant 224 : index
    %65 = vector.load %arg7[%c0_36, %c0_37, %c224] : memref<3x16x384xf32, #tpu.memory_space<vmem>>, vector<1x16x16xf32>
    %66 = vector.shape_cast %65 : vector<1x16x16xf32> to vector<16x16xf32>
    %67 = vector.shape_cast %64 : vector<16x16xf32> to vector<1x16x16xf32>
    tpu.vector_store %arg7[%c0_36, %c0_37, %c224], %67 {strides = array<i32>} : memref<3x16x384xf32, #tpu.memory_space<vmem>>, vector<1x16x16xf32>,
    %68 = vector.extract_strided_slice %7 {offsets = [240, 0], sizes = [16, 16], strides = [1, 1]} : vector<384x48xf32> to vector<16x16xf32>
    %c0_38 = arith.constant 0 : index
    %c0_39 = arith.constant 0 : index
    %c240 = arith.constant 240 : index
    %69 = vector.load %arg7[%c0_38, %c0_39, %c240] : memref<3x16x384xf32, #tpu.memory_space<vmem>>, vector<1x16x16xf32>
    %70 = vector.shape_cast %69 : vector<1x16x16xf32> to vector<16x16xf32>
    %71 = vector.shape_cast %68 : vector<16x16xf32> to vector<1x16x16xf32>
    tpu.vector_store %arg7[%c0_38, %c0_39, %c240], %71 {strides = array<i32>} : memref<3x16x384xf32, #tpu.memory_space<vmem>>, vector<1x16x16xf32>,
    %72 = vector.extract_strided_slice %7 {offsets = [256, 0], sizes = [16, 16], strides = [1, 1]} : vector<384x48xf32> to vector<16x16xf32>
    %c0_40 = arith.constant 0 : index
    %c0_41 = arith.constant 0 : index
    %c256 = arith.constant 256 : index
    %73 = vector.load %arg7[%c0_40, %c0_41, %c256] : memref<3x16x384xf32, #tpu.memory_space<vmem>>, vector<1x16x16xf32>
    %74 = vector.shape_cast %73 : vector<1x16x16xf32> to vector<16x16xf32>
    %75 = vector.shape_cast %72 : vector<16x16xf32> to vector<1x16x16xf32>
    tpu.vector_store %arg7[%c0_40, %c0_41, %c256], %75 {strides = array<i32>} : memref<3x16x384xf32, #tpu.memory_space<vmem>>, vector<1x16x16xf32>,
    %76 = vector.extract_strided_slice %7 {offsets = [272, 0], sizes = [16, 16], strides = [1, 1]} : vector<384x48xf32> to vector<16x16xf32>
    %c0_42 = arith.constant 0 : index
    %c0_43 = arith.constant 0 : index
    %c272 = arith.constant 272 : index
    %77 = vector.load %arg7[%c0_42, %c0_43, %c272] : memref<3x16x384xf32, #tpu.memory_space<vmem>>, vector<1x16x16xf32>
    %78 = vector.shape_cast %77 : vector<1x16x16xf32> to vector<16x16xf32>
    %79 = vector.shape_cast %76 : vector<16x16xf32> to vector<1x16x16xf32>
    tpu.vector_store %arg7[%c0_42, %c0_43, %c272], %79 {strides = array<i32>} : memref<3x16x384xf32, #tpu.memory_space<vmem>>, vector<1x16x16xf32>,
    %80 = vector.extract_strided_slice %7 {offsets = [288, 0], sizes = [16, 16], strides = [1, 1]} : vector<384x48xf32> to vector<16x16xf32>
    %c0_44 = arith.constant 0 : index
    %c0_45 = arith.constant 0 : index
    %c288 = arith.constant 288 : index
    %81 = vector.load %arg7[%c0_44, %c0_45, %c288] : memref<3x16x384xf32, #tpu.memory_space<vmem>>, vector<1x16x16xf32>
    %82 = vector.shape_cast %81 : vector<1x16x16xf32> to vector<16x16xf32>
    %83 = vector.shape_cast %80 : vector<16x16xf32> to vector<1x16x16xf32>
    tpu.vector_store %arg7[%c0_44, %c0_45, %c288], %83 {strides = array<i32>} : memref<3x16x384xf32, #tpu.memory_space<vmem>>, vector<1x16x16xf32>,
    %84 = vector.extract_strided_slice %7 {offsets = [304, 0], sizes = [16, 16], strides = [1, 1]} : vector<384x48xf32> to vector<16x16xf32>
    %c0_46 = arith.constant 0 : index
    %c0_47 = arith.constant 0 : index
    %c304 = arith.constant 304 : index
    %85 = vector.load %arg7[%c0_46, %c0_47, %c304] : memref<3x16x384xf32, #tpu.memory_space<vmem>>, vector<1x16x16xf32>
    %86 = vector.shape_cast %85 : vector<1x16x16xf32> to vector<16x16xf32>
    %87 = vector.shape_cast %84 : vector<16x16xf32> to vector<1x16x16xf32>
    tpu.vector_store %arg7[%c0_46, %c0_47, %c304], %87 {strides = array<i32>} : memref<3x16x384xf32, #tpu.memory_space<vmem>>, vector<1x16x16xf32>,
    %88 = vector.extract_strided_slice %7 {offsets = [320, 0], sizes = [16, 16], strides = [1, 1]} : vector<384x48xf32> to vector<16x16xf32>
    %c0_48 = arith.constant 0 : index
    %c0_49 = arith.constant 0 : index
    %c320 = arith.constant 320 : index
    %89 = vector.load %arg7[%c0_48, %c0_49, %c320] : memref<3x16x384xf32, #tpu.memory_space<vmem>>, vector<1x16x16xf32>
    %90 = vector.shape_cast %89 : vector<1x16x16xf32> to vector<16x16xf32>
    %91 = vector.shape_cast %88 : vector<16x16xf32> to vector<1x16x16xf32>
    tpu.vector_store %arg7[%c0_48, %c0_49, %c320], %91 {strides = array<i32>} : memref<3x16x384xf32, #tpu.memory_space<vmem>>, vector<1x16x16xf32>,
    %92 = vector.extract_strided_slice %7 {offsets = [336, 0], sizes = [16, 16], strides = [1, 1]} : vector<384x48xf32> to vector<16x16xf32>
    %c0_50 = arith.constant 0 : index
    %c0_51 = arith.constant 0 : index
    %c336 = arith.constant 336 : index
    %93 = vector.load %arg7[%c0_50, %c0_51, %c336] : memref<3x16x384xf32, #tpu.memory_space<vmem>>, vector<1x16x16xf32>
    %94 = vector.shape_cast %93 : vector<1x16x16xf32> to vector<16x16xf32>
    %95 = vector.shape_cast %92 : vector<16x16xf32> to vector<1x16x16xf32>
    tpu.vector_store %arg7[%c0_50, %c0_51, %c336], %95 {strides = array<i32>} : memref<3x16x384xf32, #tpu.memory_space<vmem>>, vector<1x16x16xf32>,
    %96 = vector.extract_strided_slice %7 {offsets = [352, 0], sizes = [16, 16], strides = [1, 1]} : vector<384x48xf32> to vector<16x16xf32>
    %c0_52 = arith.constant 0 : index
    %c0_53 = arith.constant 0 : index
    %c352 = arith.constant 352 : index
    %97 = vector.load %arg7[%c0_52, %c0_53, %c352] : memref<3x16x384xf32, #tpu.memory_space<vmem>>, vector<1x16x16xf32>
    %98 = vector.shape_cast %97 : vector<1x16x16xf32> to vector<16x16xf32>
    %99 = vector.shape_cast %96 : vector<16x16xf32> to vector<1x16x16xf32>
    tpu.vector_store %arg7[%c0_52, %c0_53, %c352], %99 {strides = array<i32>} : memref<3x16x384xf32, #tpu.memory_space<vmem>>, vector<1x16x16xf32>,
    %100 = vector.extract_strided_slice %7 {offsets = [368, 0], sizes = [16, 16], strides = [1, 1]} : vector<384x48xf32> to vector<16x16xf32>
    %c0_54 = arith.constant 0 : index
    %c0_55 = arith.constant 0 : index
    %c368 = arith.constant 368 : index
    %101 = vector.load %arg7[%c0_54, %c0_55, %c368] : memref<3x16x384xf32, #tpu.memory_space<vmem>>, vector<1x16x16xf32>
    %102 = vector.shape_cast %101 : vector<1x16x16xf32> to vector<16x16xf32>
    %103 = vector.shape_cast %100 : vector<16x16xf32> to vector<1x16x16xf32>
    tpu.vector_store %arg7[%c0_54, %c0_55, %c368], %103 {strides = array<i32>} : memref<3x16x384xf32, #tpu.memory_space<vmem>>, vector<1x16x16xf32>,
    %c0_56 = arith.constant 0 : index
    %c0_57 = arith.constant 0 : index
    %c0_58 = arith.constant 0 : index
    %104 = vector.load %arg5[%c0_56, %c0_57, %c0_58] : memref<3x16x16xf32, #tpu.memory_space<vmem>>, vector<1x16x16xf32>
    %105 = vector.shape_cast %104 : vector<1x16x16xf32> to vector<16x16xf32>
    %c0_59 = arith.constant 0 : index
    %c0_60 = arith.constant 0 : index
    %c0_61 = arith.constant 0 : index
    %106 = vector.load %arg7[%c0_59, %c0_60, %c0_61] : memref<3x16x384xf32, #tpu.memory_space<vmem>>, vector<1x16x384xf32>
    %107 = vector.shape_cast %106 : vector<1x16x384xf32> to vector<16x384xf32>
    %cst_62 = arith.constant dense<0.000000e+00> : vector<16x384xf32>
    %108 = tpu.matmul %105, %107, %cst_62 {dimension_numbers = #tpu.dot_dimension_numbers<[1], [0], [0], [1], [0, 0, 1, 1], [], []>} : vector<16x16xf32>, vector<16x384xf32>, vector<16x384xf32> -> vector<16x384xf32>
    %109 = vector.extract_strided_slice %7 {offsets = [0, 16], sizes = [16, 16], strides = [1, 1]} : vector<384x48xf32> to vector<16x16xf32>
    %c1 = arith.constant 1 : index
    %c0_63 = arith.constant 0 : index
    %c0_64 = arith.constant 0 : index
    %110 = vector.load %arg7[%c1, %c0_63, %c0_64] : memref<3x16x384xf32, #tpu.memory_space<vmem>>, vector<1x16x16xf32>
    %111 = vector.shape_cast %110 : vector<1x16x16xf32> to vector<16x16xf32>
    %112 = vector.shape_cast %109 : vector<16x16xf32> to vector<1x16x16xf32>
    tpu.vector_store %arg7[%c1, %c0_63, %c0_64], %112 {strides = array<i32>} : memref<3x16x384xf32, #tpu.memory_space<vmem>>, vector<1x16x16xf32>,
    %113 = vector.extract_strided_slice %7 {offsets = [16, 16], sizes = [16, 16], strides = [1, 1]} : vector<384x48xf32> to vector<16x16xf32>
    %c1_65 = arith.constant 1 : index
    %c0_66 = arith.constant 0 : index
    %c16_67 = arith.constant 16 : index
    %114 = vector.load %arg7[%c1_65, %c0_66, %c16_67] : memref<3x16x384xf32, #tpu.memory_space<vmem>>, vector<1x16x16xf32>
    %115 = vector.shape_cast %114 : vector<1x16x16xf32> to vector<16x16xf32>
    %116 = vector.shape_cast %113 : vector<16x16xf32> to vector<1x16x16xf32>
    tpu.vector_store %arg7[%c1_65, %c0_66, %c16_67], %116 {strides = array<i32>} : memref<3x16x384xf32, #tpu.memory_space<vmem>>, vector<1x16x16xf32>,
    %117 = vector.extract_strided_slice %7 {offsets = [32, 16], sizes = [16, 16], strides = [1, 1]} : vector<384x48xf32> to vector<16x16xf32>
    %c1_68 = arith.constant 1 : index
    %c0_69 = arith.constant 0 : index
    %c32_70 = arith.constant 32 : index
    %118 = vector.load %arg7[%c1_68, %c0_69, %c32_70] : memref<3x16x384xf32, #tpu.memory_space<vmem>>, vector<1x16x16xf32>
    %119 = vector.shape_cast %118 : vector<1x16x16xf32> to vector<16x16xf32>
    %120 = vector.shape_cast %117 : vector<16x16xf32> to vector<1x16x16xf32>
    tpu.vector_store %arg7[%c1_68, %c0_69, %c32_70], %120 {strides = array<i32>} : memref<3x16x384xf32, #tpu.memory_space<vmem>>, vector<1x16x16xf32>,
    %121 = vector.extract_strided_slice %7 {offsets = [48, 16], sizes = [16, 16], strides = [1, 1]} : vector<384x48xf32> to vector<16x16xf32>
    %c1_71 = arith.constant 1 : index
    %c0_72 = arith.constant 0 : index
    %c48_73 = arith.constant 48 : index
    %122 = vector.load %arg7[%c1_71, %c0_72, %c48_73] : memref<3x16x384xf32, #tpu.memory_space<vmem>>, vector<1x16x16xf32>
    %123 = vector.shape_cast %122 : vector<1x16x16xf32> to vector<16x16xf32>
    %124 = vector.shape_cast %121 : vector<16x16xf32> to vector<1x16x16xf32>
    tpu.vector_store %arg7[%c1_71, %c0_72, %c48_73], %124 {strides = array<i32>} : memref<3x16x384xf32, #tpu.memory_space<vmem>>, vector<1x16x16xf32>,
    %125 = vector.extract_strided_slice %7 {offsets = [64, 16], sizes = [16, 16], strides = [1, 1]} : vector<384x48xf32> to vector<16x16xf32>
    %c1_74 = arith.constant 1 : index
    %c0_75 = arith.constant 0 : index
    %c64_76 = arith.constant 64 : index
    %126 = vector.load %arg7[%c1_74, %c0_75, %c64_76] : memref<3x16x384xf32, #tpu.memory_space<vmem>>, vector<1x16x16xf32>
    %127 = vector.shape_cast %126 : vector<1x16x16xf32> to vector<16x16xf32>
    %128 = vector.shape_cast %125 : vector<16x16xf32> to vector<1x16x16xf32>
    tpu.vector_store %arg7[%c1_74, %c0_75, %c64_76], %128 {strides = array<i32>} : memref<3x16x384xf32, #tpu.memory_space<vmem>>, vector<1x16x16xf32>,
    %129 = vector.extract_strided_slice %7 {offsets = [80, 16], sizes = [16, 16], strides = [1, 1]} : vector<384x48xf32> to vector<16x16xf32>
    %c1_77 = arith.constant 1 : index
    %c0_78 = arith.constant 0 : index
    %c80_79 = arith.constant 80 : index
    %130 = vector.load %arg7[%c1_77, %c0_78, %c80_79] : memref<3x16x384xf32, #tpu.memory_space<vmem>>, vector<1x16x16xf32>
    %131 = vector.shape_cast %130 : vector<1x16x16xf32> to vector<16x16xf32>
    %132 = vector.shape_cast %129 : vector<16x16xf32> to vector<1x16x16xf32>
    tpu.vector_store %arg7[%c1_77, %c0_78, %c80_79], %132 {strides = array<i32>} : memref<3x16x384xf32, #tpu.memory_space<vmem>>, vector<1x16x16xf32>,
    %133 = vector.extract_strided_slice %7 {offsets = [96, 16], sizes = [16, 16], strides = [1, 1]} : vector<384x48xf32> to vector<16x16xf32>
    %c1_80 = arith.constant 1 : index
    %c0_81 = arith.constant 0 : index
    %c96_82 = arith.constant 96 : index
    %134 = vector.load %arg7[%c1_80, %c0_81, %c96_82] : memref<3x16x384xf32, #tpu.memory_space<vmem>>, vector<1x16x16xf32>
    %135 = vector.shape_cast %134 : vector<1x16x16xf32> to vector<16x16xf32>
    %136 = vector.shape_cast %133 : vector<16x16xf32> to vector<1x16x16xf32>
    tpu.vector_store %arg7[%c1_80, %c0_81, %c96_82], %136 {strides = array<i32>} : memref<3x16x384xf32, #tpu.memory_space<vmem>>, vector<1x16x16xf32>,
    %137 = vector.extract_strided_slice %7 {offsets = [112, 16], sizes = [16, 16], strides = [1, 1]} : vector<384x48xf32> to vector<16x16xf32>
    %c1_83 = arith.constant 1 : index
    %c0_84 = arith.constant 0 : index
    %c112_85 = arith.constant 112 : index
    %138 = vector.load %arg7[%c1_83, %c0_84, %c112_85] : memref<3x16x384xf32, #tpu.memory_space<vmem>>, vector<1x16x16xf32>
    %139 = vector.shape_cast %138 : vector<1x16x16xf32> to vector<16x16xf32>
    %140 = vector.shape_cast %137 : vector<16x16xf32> to vector<1x16x16xf32>
    tpu.vector_store %arg7[%c1_83, %c0_84, %c112_85], %140 {strides = array<i32>} : memref<3x16x384xf32, #tpu.memory_space<vmem>>, vector<1x16x16xf32>,
    %141 = vector.extract_strided_slice %7 {offsets = [128, 16], sizes = [16, 16], strides = [1, 1]} : vector<384x48xf32> to vector<16x16xf32>
    %c1_86 = arith.constant 1 : index
    %c0_87 = arith.constant 0 : index
    %c128_88 = arith.constant 128 : index
    %142 = vector.load %arg7[%c1_86, %c0_87, %c128_88] : memref<3x16x384xf32, #tpu.memory_space<vmem>>, vector<1x16x16xf32>
    %143 = vector.shape_cast %142 : vector<1x16x16xf32> to vector<16x16xf32>
    %144 = vector.shape_cast %141 : vector<16x16xf32> to vector<1x16x16xf32>
    tpu.vector_store %arg7[%c1_86, %c0_87, %c128_88], %144 {strides = array<i32>} : memref<3x16x384xf32, #tpu.memory_space<vmem>>, vector<1x16x16xf32>,
    %145 = vector.extract_strided_slice %7 {offsets = [144, 16], sizes = [16, 16], strides = [1, 1]} : vector<384x48xf32> to vector<16x16xf32>
    %c1_89 = arith.constant 1 : index
    %c0_90 = arith.constant 0 : index
    %c144_91 = arith.constant 144 : index
    %146 = vector.load %arg7[%c1_89, %c0_90, %c144_91] : memref<3x16x384xf32, #tpu.memory_space<vmem>>, vector<1x16x16xf32>
    %147 = vector.shape_cast %146 : vector<1x16x16xf32> to vector<16x16xf32>
    %148 = vector.shape_cast %145 : vector<16x16xf32> to vector<1x16x16xf32>
    tpu.vector_store %arg7[%c1_89, %c0_90, %c144_91], %148 {strides = array<i32>} : memref<3x16x384xf32, #tpu.memory_space<vmem>>, vector<1x16x16xf32>,
    %149 = vector.extract_strided_slice %7 {offsets = [160, 16], sizes = [16, 16], strides = [1, 1]} : vector<384x48xf32> to vector<16x16xf32>
    %c1_92 = arith.constant 1 : index
    %c0_93 = arith.constant 0 : index
    %c160_94 = arith.constant 160 : index
    %150 = vector.load %arg7[%c1_92, %c0_93, %c160_94] : memref<3x16x384xf32, #tpu.memory_space<vmem>>, vector<1x16x16xf32>
    %151 = vector.shape_cast %150 : vector<1x16x16xf32> to vector<16x16xf32>
    %152 = vector.shape_cast %149 : vector<16x16xf32> to vector<1x16x16xf32>
    tpu.vector_store %arg7[%c1_92, %c0_93, %c160_94], %152 {strides = array<i32>} : memref<3x16x384xf32, #tpu.memory_space<vmem>>, vector<1x16x16xf32>,
    %153 = vector.extract_strided_slice %7 {offsets = [176, 16], sizes = [16, 16], strides = [1, 1]} : vector<384x48xf32> to vector<16x16xf32>
    %c1_95 = arith.constant 1 : index
    %c0_96 = arith.constant 0 : index
    %c176_97 = arith.constant 176 : index
    %154 = vector.load %arg7[%c1_95, %c0_96, %c176_97] : memref<3x16x384xf32, #tpu.memory_space<vmem>>, vector<1x16x16xf32>
    %155 = vector.shape_cast %154 : vector<1x16x16xf32> to vector<16x16xf32>
    %156 = vector.shape_cast %153 : vector<16x16xf32> to vector<1x16x16xf32>
    tpu.vector_store %arg7[%c1_95, %c0_96, %c176_97], %156 {strides = array<i32>} : memref<3x16x384xf32, #tpu.memory_space<vmem>>, vector<1x16x16xf32>,
    %157 = vector.extract_strided_slice %7 {offsets = [192, 16], sizes = [16, 16], strides = [1, 1]} : vector<384x48xf32> to vector<16x16xf32>
    %c1_98 = arith.constant 1 : index
    %c0_99 = arith.constant 0 : index
    %c192_100 = arith.constant 192 : index
    %158 = vector.load %arg7[%c1_98, %c0_99, %c192_100] : memref<3x16x384xf32, #tpu.memory_space<vmem>>, vector<1x16x16xf32>
    %159 = vector.shape_cast %158 : vector<1x16x16xf32> to vector<16x16xf32>
    %160 = vector.shape_cast %157 : vector<16x16xf32> to vector<1x16x16xf32>
    tpu.vector_store %arg7[%c1_98, %c0_99, %c192_100], %160 {strides = array<i32>} : memref<3x16x384xf32, #tpu.memory_space<vmem>>, vector<1x16x16xf32>,
    %161 = vector.extract_strided_slice %7 {offsets = [208, 16], sizes = [16, 16], strides = [1, 1]} : vector<384x48xf32> to vector<16x16xf32>
    %c1_101 = arith.constant 1 : index
    %c0_102 = arith.constant 0 : index
    %c208_103 = arith.constant 208 : index
    %162 = vector.load %arg7[%c1_101, %c0_102, %c208_103] : memref<3x16x384xf32, #tpu.memory_space<vmem>>, vector<1x16x16xf32>
    %163 = vector.shape_cast %162 : vector<1x16x16xf32> to vector<16x16xf32>
    %164 = vector.shape_cast %161 : vector<16x16xf32> to vector<1x16x16xf32>
    tpu.vector_store %arg7[%c1_101, %c0_102, %c208_103], %164 {strides = array<i32>} : memref<3x16x384xf32, #tpu.memory_space<vmem>>, vector<1x16x16xf32>,
    %165 = vector.extract_strided_slice %7 {offsets = [224, 16], sizes = [16, 16], strides = [1, 1]} : vector<384x48xf32> to vector<16x16xf32>
    %c1_104 = arith.constant 1 : index
    %c0_105 = arith.constant 0 : index
    %c224_106 = arith.constant 224 : index
    %166 = vector.load %arg7[%c1_104, %c0_105, %c224_106] : memref<3x16x384xf32, #tpu.memory_space<vmem>>, vector<1x16x16xf32>
    %167 = vector.shape_cast %166 : vector<1x16x16xf32> to vector<16x16xf32>
    %168 = vector.shape_cast %165 : vector<16x16xf32> to vector<1x16x16xf32>
    tpu.vector_store %arg7[%c1_104, %c0_105, %c224_106], %168 {strides = array<i32>} : memref<3x16x384xf32, #tpu.memory_space<vmem>>, vector<1x16x16xf32>,
    %169 = vector.extract_strided_slice %7 {offsets = [240, 16], sizes = [16, 16], strides = [1, 1]} : vector<384x48xf32> to vector<16x16xf32>
    %c1_107 = arith.constant 1 : index
    %c0_108 = arith.constant 0 : index
    %c240_109 = arith.constant 240 : index
    %170 = vector.load %arg7[%c1_107, %c0_108, %c240_109] : memref<3x16x384xf32, #tpu.memory_space<vmem>>, vector<1x16x16xf32>
    %171 = vector.shape_cast %170 : vector<1x16x16xf32> to vector<16x16xf32>
    %172 = vector.shape_cast %169 : vector<16x16xf32> to vector<1x16x16xf32>
    tpu.vector_store %arg7[%c1_107, %c0_108, %c240_109], %172 {strides = array<i32>} : memref<3x16x384xf32, #tpu.memory_space<vmem>>, vector<1x16x16xf32>,
    %173 = vector.extract_strided_slice %7 {offsets = [256, 16], sizes = [16, 16], strides = [1, 1]} : vector<384x48xf32> to vector<16x16xf32>
    %c1_110 = arith.constant 1 : index
    %c0_111 = arith.constant 0 : index
    %c256_112 = arith.constant 256 : index
    %174 = vector.load %arg7[%c1_110, %c0_111, %c256_112] : memref<3x16x384xf32, #tpu.memory_space<vmem>>, vector<1x16x16xf32>
    %175 = vector.shape_cast %174 : vector<1x16x16xf32> to vector<16x16xf32>
    %176 = vector.shape_cast %173 : vector<16x16xf32> to vector<1x16x16xf32>
    tpu.vector_store %arg7[%c1_110, %c0_111, %c256_112], %176 {strides = array<i32>} : memref<3x16x384xf32, #tpu.memory_space<vmem>>, vector<1x16x16xf32>,
    %177 = vector.extract_strided_slice %7 {offsets = [272, 16], sizes = [16, 16], strides = [1, 1]} : vector<384x48xf32> to vector<16x16xf32>
    %c1_113 = arith.constant 1 : index
    %c0_114 = arith.constant 0 : index
    %c272_115 = arith.constant 272 : index
    %178 = vector.load %arg7[%c1_113, %c0_114, %c272_115] : memref<3x16x384xf32, #tpu.memory_space<vmem>>, vector<1x16x16xf32>
    %179 = vector.shape_cast %178 : vector<1x16x16xf32> to vector<16x16xf32>
    %180 = vector.shape_cast %177 : vector<16x16xf32> to vector<1x16x16xf32>
    tpu.vector_store %arg7[%c1_113, %c0_114, %c272_115], %180 {strides = array<i32>} : memref<3x16x384xf32, #tpu.memory_space<vmem>>, vector<1x16x16xf32>,
    %181 = vector.extract_strided_slice %7 {offsets = [288, 16], sizes = [16, 16], strides = [1, 1]} : vector<384x48xf32> to vector<16x16xf32>
    %c1_116 = arith.constant 1 : index
    %c0_117 = arith.constant 0 : index
    %c288_118 = arith.constant 288 : index
    %182 = vector.load %arg7[%c1_116, %c0_117, %c288_118] : memref<3x16x384xf32, #tpu.memory_space<vmem>>, vector<1x16x16xf32>
    %183 = vector.shape_cast %182 : vector<1x16x16xf32> to vector<16x16xf32>
    %184 = vector.shape_cast %181 : vector<16x16xf32> to vector<1x16x16xf32>
    tpu.vector_store %arg7[%c1_116, %c0_117, %c288_118], %184 {strides = array<i32>} : memref<3x16x384xf32, #tpu.memory_space<vmem>>, vector<1x16x16xf32>,
    %185 = vector.extract_strided_slice %7 {offsets = [304, 16], sizes = [16, 16], strides = [1, 1]} : vector<384x48xf32> to vector<16x16xf32>
    %c1_119 = arith.constant 1 : index
    %c0_120 = arith.constant 0 : index
    %c304_121 = arith.constant 304 : index
    %186 = vector.load %arg7[%c1_119, %c0_120, %c304_121] : memref<3x16x384xf32, #tpu.memory_space<vmem>>, vector<1x16x16xf32>
    %187 = vector.shape_cast %186 : vector<1x16x16xf32> to vector<16x16xf32>
    %188 = vector.shape_cast %185 : vector<16x16xf32> to vector<1x16x16xf32>
    tpu.vector_store %arg7[%c1_119, %c0_120, %c304_121], %188 {strides = array<i32>} : memref<3x16x384xf32, #tpu.memory_space<vmem>>, vector<1x16x16xf32>,
    %189 = vector.extract_strided_slice %7 {offsets = [320, 16], sizes = [16, 16], strides = [1, 1]} : vector<384x48xf32> to vector<16x16xf32>
    %c1_122 = arith.constant 1 : index
    %c0_123 = arith.constant 0 : index
    %c320_124 = arith.constant 320 : index
    %190 = vector.load %arg7[%c1_122, %c0_123, %c320_124] : memref<3x16x384xf32, #tpu.memory_space<vmem>>, vector<1x16x16xf32>
    %191 = vector.shape_cast %190 : vector<1x16x16xf32> to vector<16x16xf32>
    %192 = vector.shape_cast %189 : vector<16x16xf32> to vector<1x16x16xf32>
    tpu.vector_store %arg7[%c1_122, %c0_123, %c320_124], %192 {strides = array<i32>} : memref<3x16x384xf32, #tpu.memory_space<vmem>>, vector<1x16x16xf32>,
    %193 = vector.extract_strided_slice %7 {offsets = [336, 16], sizes = [16, 16], strides = [1, 1]} : vector<384x48xf32> to vector<16x16xf32>
    %c1_125 = arith.constant 1 : index
    %c0_126 = arith.constant 0 : index
    %c336_127 = arith.constant 336 : index
    %194 = vector.load %arg7[%c1_125, %c0_126, %c336_127] : memref<3x16x384xf32, #tpu.memory_space<vmem>>, vector<1x16x16xf32>
    %195 = vector.shape_cast %194 : vector<1x16x16xf32> to vector<16x16xf32>
    %196 = vector.shape_cast %193 : vector<16x16xf32> to vector<1x16x16xf32>
    tpu.vector_store %arg7[%c1_125, %c0_126, %c336_127], %196 {strides = array<i32>} : memref<3x16x384xf32, #tpu.memory_space<vmem>>, vector<1x16x16xf32>,
    %197 = vector.extract_strided_slice %7 {offsets = [352, 16], sizes = [16, 16], strides = [1, 1]} : vector<384x48xf32> to vector<16x16xf32>
    %c1_128 = arith.constant 1 : index
    %c0_129 = arith.constant 0 : index
    %c352_130 = arith.constant 352 : index
    %198 = vector.load %arg7[%c1_128, %c0_129, %c352_130] : memref<3x16x384xf32, #tpu.memory_space<vmem>>, vector<1x16x16xf32>
    %199 = vector.shape_cast %198 : vector<1x16x16xf32> to vector<16x16xf32>
    %200 = vector.shape_cast %197 : vector<16x16xf32> to vector<1x16x16xf32>
    tpu.vector_store %arg7[%c1_128, %c0_129, %c352_130], %200 {strides = array<i32>} : memref<3x16x384xf32, #tpu.memory_space<vmem>>, vector<1x16x16xf32>,
    %201 = vector.extract_strided_slice %7 {offsets = [368, 16], sizes = [16, 16], strides = [1, 1]} : vector<384x48xf32> to vector<16x16xf32>
    %c1_131 = arith.constant 1 : index
    %c0_132 = arith.constant 0 : index
    %c368_133 = arith.constant 368 : index
    %202 = vector.load %arg7[%c1_131, %c0_132, %c368_133] : memref<3x16x384xf32, #tpu.memory_space<vmem>>, vector<1x16x16xf32>
    %203 = vector.shape_cast %202 : vector<1x16x16xf32> to vector<16x16xf32>
    %204 = vector.shape_cast %201 : vector<16x16xf32> to vector<1x16x16xf32>
    tpu.vector_store %arg7[%c1_131, %c0_132, %c368_133], %204 {strides = array<i32>} : memref<3x16x384xf32, #tpu.memory_space<vmem>>, vector<1x16x16xf32>,
    %c1_134 = arith.constant 1 : index
    %c0_135 = arith.constant 0 : index
    %c0_136 = arith.constant 0 : index
    %205 = vector.load %arg5[%c1_134, %c0_135, %c0_136] : memref<3x16x16xf32, #tpu.memory_space<vmem>>, vector<1x16x16xf32>
    %206 = vector.shape_cast %205 : vector<1x16x16xf32> to vector<16x16xf32>
    %c1_137 = arith.constant 1 : index
    %c0_138 = arith.constant 0 : index
    %c0_139 = arith.constant 0 : index
    %207 = vector.load %arg7[%c1_137, %c0_138, %c0_139] : memref<3x16x384xf32, #tpu.memory_space<vmem>>, vector<1x16x384xf32>
    %208 = vector.shape_cast %207 : vector<1x16x384xf32> to vector<16x384xf32>
    %cst_140 = arith.constant dense<0.000000e+00> : vector<16x384xf32>
    %209 = tpu.matmul %206, %208, %cst_140 {dimension_numbers = #tpu.dot_dimension_numbers<[1], [0], [0], [1], [0, 0, 1, 1], [], []>} : vector<16x16xf32>, vector<16x384xf32>, vector<16x384xf32> -> vector<16x384xf32>
    %210 = arith.addf %108, %209 : vector<16x384xf32>
    %211 = vector.extract_strided_slice %7 {offsets = [0, 32], sizes = [16, 16], strides = [1, 1]} : vector<384x48xf32> to vector<16x16xf32>
    %c2 = arith.constant 2 : index
    %c0_141 = arith.constant 0 : index
    %c0_142 = arith.constant 0 : index
    %212 = vector.load %arg7[%c2, %c0_141, %c0_142] : memref<3x16x384xf32, #tpu.memory_space<vmem>>, vector<1x16x16xf32>
    %213 = vector.shape_cast %212 : vector<1x16x16xf32> to vector<16x16xf32>
    %214 = vector.shape_cast %211 : vector<16x16xf32> to vector<1x16x16xf32>
    tpu.vector_store %arg7[%c2, %c0_141, %c0_142], %214 {strides = array<i32>} : memref<3x16x384xf32, #tpu.memory_space<vmem>>, vector<1x16x16xf32>,
    %215 = vector.extract_strided_slice %7 {offsets = [16, 32], sizes = [16, 16], strides = [1, 1]} : vector<384x48xf32> to vector<16x16xf32>
    %c2_143 = arith.constant 2 : index
    %c0_144 = arith.constant 0 : index
    %c16_145 = arith.constant 16 : index
    %216 = vector.load %arg7[%c2_143, %c0_144, %c16_145] : memref<3x16x384xf32, #tpu.memory_space<vmem>>, vector<1x16x16xf32>
    %217 = vector.shape_cast %216 : vector<1x16x16xf32> to vector<16x16xf32>
    %218 = vector.shape_cast %215 : vector<16x16xf32> to vector<1x16x16xf32>
    tpu.vector_store %arg7[%c2_143, %c0_144, %c16_145], %218 {strides = array<i32>} : memref<3x16x384xf32, #tpu.memory_space<vmem>>, vector<1x16x16xf32>,
    %219 = vector.extract_strided_slice %7 {offsets = [32, 32], sizes = [16, 16], strides = [1, 1]} : vector<384x48xf32> to vector<16x16xf32>
    %c2_146 = arith.constant 2 : index
    %c0_147 = arith.constant 0 : index
    %c32_148 = arith.constant 32 : index
    %220 = vector.load %arg7[%c2_146, %c0_147, %c32_148] : memref<3x16x384xf32, #tpu.memory_space<vmem>>, vector<1x16x16xf32>
    %221 = vector.shape_cast %220 : vector<1x16x16xf32> to vector<16x16xf32>
    %222 = vector.shape_cast %219 : vector<16x16xf32> to vector<1x16x16xf32>
    tpu.vector_store %arg7[%c2_146, %c0_147, %c32_148], %222 {strides = array<i32>} : memref<3x16x384xf32, #tpu.memory_space<vmem>>, vector<1x16x16xf32>,
    %223 = vector.extract_strided_slice %7 {offsets = [48, 32], sizes = [16, 16], strides = [1, 1]} : vector<384x48xf32> to vector<16x16xf32>
    %c2_149 = arith.constant 2 : index
    %c0_150 = arith.constant 0 : index
    %c48_151 = arith.constant 48 : index
    %224 = vector.load %arg7[%c2_149, %c0_150, %c48_151] : memref<3x16x384xf32, #tpu.memory_space<vmem>>, vector<1x16x16xf32>
    %225 = vector.shape_cast %224 : vector<1x16x16xf32> to vector<16x16xf32>
    %226 = vector.shape_cast %223 : vector<16x16xf32> to vector<1x16x16xf32>
    tpu.vector_store %arg7[%c2_149, %c0_150, %c48_151], %226 {strides = array<i32>} : memref<3x16x384xf32, #tpu.memory_space<vmem>>, vector<1x16x16xf32>,
    %227 = vector.extract_strided_slice %7 {offsets = [64, 32], sizes = [16, 16], strides = [1, 1]} : vector<384x48xf32> to vector<16x16xf32>
    %c2_152 = arith.constant 2 : index
    %c0_153 = arith.constant 0 : index
    %c64_154 = arith.constant 64 : index
    %228 = vector.load %arg7[%c2_152, %c0_153, %c64_154] : memref<3x16x384xf32, #tpu.memory_space<vmem>>, vector<1x16x16xf32>
    %229 = vector.shape_cast %228 : vector<1x16x16xf32> to vector<16x16xf32>
    %230 = vector.shape_cast %227 : vector<16x16xf32> to vector<1x16x16xf32>
    tpu.vector_store %arg7[%c2_152, %c0_153, %c64_154], %230 {strides = array<i32>} : memref<3x16x384xf32, #tpu.memory_space<vmem>>, vector<1x16x16xf32>,
    %231 = vector.extract_strided_slice %7 {offsets = [80, 32], sizes = [16, 16], strides = [1, 1]} : vector<384x48xf32> to vector<16x16xf32>
    %c2_155 = arith.constant 2 : index
    %c0_156 = arith.constant 0 : index
    %c80_157 = arith.constant 80 : index
    %232 = vector.load %arg7[%c2_155, %c0_156, %c80_157] : memref<3x16x384xf32, #tpu.memory_space<vmem>>, vector<1x16x16xf32>
    %233 = vector.shape_cast %232 : vector<1x16x16xf32> to vector<16x16xf32>
    %234 = vector.shape_cast %231 : vector<16x16xf32> to vector<1x16x16xf32>
    tpu.vector_store %arg7[%c2_155, %c0_156, %c80_157], %234 {strides = array<i32>} : memref<3x16x384xf32, #tpu.memory_space<vmem>>, vector<1x16x16xf32>,
    %235 = vector.extract_strided_slice %7 {offsets = [96, 32], sizes = [16, 16], strides = [1, 1]} : vector<384x48xf32> to vector<16x16xf32>
    %c2_158 = arith.constant 2 : index
    %c0_159 = arith.constant 0 : index
    %c96_160 = arith.constant 96 : index
    %236 = vector.load %arg7[%c2_158, %c0_159, %c96_160] : memref<3x16x384xf32, #tpu.memory_space<vmem>>, vector<1x16x16xf32>
    %237 = vector.shape_cast %236 : vector<1x16x16xf32> to vector<16x16xf32>
    %238 = vector.shape_cast %235 : vector<16x16xf32> to vector<1x16x16xf32>
    tpu.vector_store %arg7[%c2_158, %c0_159, %c96_160], %238 {strides = array<i32>} : memref<3x16x384xf32, #tpu.memory_space<vmem>>, vector<1x16x16xf32>,
    %239 = vector.extract_strided_slice %7 {offsets = [112, 32], sizes = [16, 16], strides = [1, 1]} : vector<384x48xf32> to vector<16x16xf32>
    %c2_161 = arith.constant 2 : index
    %c0_162 = arith.constant 0 : index
    %c112_163 = arith.constant 112 : index
    %240 = vector.load %arg7[%c2_161, %c0_162, %c112_163] : memref<3x16x384xf32, #tpu.memory_space<vmem>>, vector<1x16x16xf32>
    %241 = vector.shape_cast %240 : vector<1x16x16xf32> to vector<16x16xf32>
    %242 = vector.shape_cast %239 : vector<16x16xf32> to vector<1x16x16xf32>
    tpu.vector_store %arg7[%c2_161, %c0_162, %c112_163], %242 {strides = array<i32>} : memref<3x16x384xf32, #tpu.memory_space<vmem>>, vector<1x16x16xf32>,
    %243 = vector.extract_strided_slice %7 {offsets = [128, 32], sizes = [16, 16], strides = [1, 1]} : vector<384x48xf32> to vector<16x16xf32>
    %c2_164 = arith.constant 2 : index
    %c0_165 = arith.constant 0 : index
    %c128_166 = arith.constant 128 : index
    %244 = vector.load %arg7[%c2_164, %c0_165, %c128_166] : memref<3x16x384xf32, #tpu.memory_space<vmem>>, vector<1x16x16xf32>
    %245 = vector.shape_cast %244 : vector<1x16x16xf32> to vector<16x16xf32>
    %246 = vector.shape_cast %243 : vector<16x16xf32> to vector<1x16x16xf32>
    tpu.vector_store %arg7[%c2_164, %c0_165, %c128_166], %246 {strides = array<i32>} : memref<3x16x384xf32, #tpu.memory_space<vmem>>, vector<1x16x16xf32>,
    %247 = vector.extract_strided_slice %7 {offsets = [144, 32], sizes = [16, 16], strides = [1, 1]} : vector<384x48xf32> to vector<16x16xf32>
    %c2_167 = arith.constant 2 : index
    %c0_168 = arith.constant 0 : index
    %c144_169 = arith.constant 144 : index
    %248 = vector.load %arg7[%c2_167, %c0_168, %c144_169] : memref<3x16x384xf32, #tpu.memory_space<vmem>>, vector<1x16x16xf32>
    %249 = vector.shape_cast %248 : vector<1x16x16xf32> to vector<16x16xf32>
    %250 = vector.shape_cast %247 : vector<16x16xf32> to vector<1x16x16xf32>
    tpu.vector_store %arg7[%c2_167, %c0_168, %c144_169], %250 {strides = array<i32>} : memref<3x16x384xf32, #tpu.memory_space<vmem>>, vector<1x16x16xf32>,
    %251 = vector.extract_strided_slice %7 {offsets = [160, 32], sizes = [16, 16], strides = [1, 1]} : vector<384x48xf32> to vector<16x16xf32>
    %c2_170 = arith.constant 2 : index
    %c0_171 = arith.constant 0 : index
    %c160_172 = arith.constant 160 : index
    %252 = vector.load %arg7[%c2_170, %c0_171, %c160_172] : memref<3x16x384xf32, #tpu.memory_space<vmem>>, vector<1x16x16xf32>
    %253 = vector.shape_cast %252 : vector<1x16x16xf32> to vector<16x16xf32>
    %254 = vector.shape_cast %251 : vector<16x16xf32> to vector<1x16x16xf32>
    tpu.vector_store %arg7[%c2_170, %c0_171, %c160_172], %254 {strides = array<i32>} : memref<3x16x384xf32, #tpu.memory_space<vmem>>, vector<1x16x16xf32>,
    %255 = vector.extract_strided_slice %7 {offsets = [176, 32], sizes = [16, 16], strides = [1, 1]} : vector<384x48xf32> to vector<16x16xf32>
    %c2_173 = arith.constant 2 : index
    %c0_174 = arith.constant 0 : index
    %c176_175 = arith.constant 176 : index
    %256 = vector.load %arg7[%c2_173, %c0_174, %c176_175] : memref<3x16x384xf32, #tpu.memory_space<vmem>>, vector<1x16x16xf32>
    %257 = vector.shape_cast %256 : vector<1x16x16xf32> to vector<16x16xf32>
    %258 = vector.shape_cast %255 : vector<16x16xf32> to vector<1x16x16xf32>
    tpu.vector_store %arg7[%c2_173, %c0_174, %c176_175], %258 {strides = array<i32>} : memref<3x16x384xf32, #tpu.memory_space<vmem>>, vector<1x16x16xf32>,
    %259 = vector.extract_strided_slice %7 {offsets = [192, 32], sizes = [16, 16], strides = [1, 1]} : vector<384x48xf32> to vector<16x16xf32>
    %c2_176 = arith.constant 2 : index
    %c0_177 = arith.constant 0 : index
    %c192_178 = arith.constant 192 : index
    %260 = vector.load %arg7[%c2_176, %c0_177, %c192_178] : memref<3x16x384xf32, #tpu.memory_space<vmem>>, vector<1x16x16xf32>
    %261 = vector.shape_cast %260 : vector<1x16x16xf32> to vector<16x16xf32>
    %262 = vector.shape_cast %259 : vector<16x16xf32> to vector<1x16x16xf32>
    tpu.vector_store %arg7[%c2_176, %c0_177, %c192_178], %262 {strides = array<i32>} : memref<3x16x384xf32, #tpu.memory_space<vmem>>, vector<1x16x16xf32>,
    %263 = vector.extract_strided_slice %7 {offsets = [208, 32], sizes = [16, 16], strides = [1, 1]} : vector<384x48xf32> to vector<16x16xf32>
    %c2_179 = arith.constant 2 : index
    %c0_180 = arith.constant 0 : index
    %c208_181 = arith.constant 208 : index
    %264 = vector.load %arg7[%c2_179, %c0_180, %c208_181] : memref<3x16x384xf32, #tpu.memory_space<vmem>>, vector<1x16x16xf32>
    %265 = vector.shape_cast %264 : vector<1x16x16xf32> to vector<16x16xf32>
    %266 = vector.shape_cast %263 : vector<16x16xf32> to vector<1x16x16xf32>
    tpu.vector_store %arg7[%c2_179, %c0_180, %c208_181], %266 {strides = array<i32>} : memref<3x16x384xf32, #tpu.memory_space<vmem>>, vector<1x16x16xf32>,
    %267 = vector.extract_strided_slice %7 {offsets = [224, 32], sizes = [16, 16], strides = [1, 1]} : vector<384x48xf32> to vector<16x16xf32>
    %c2_182 = arith.constant 2 : index
    %c0_183 = arith.constant 0 : index
    %c224_184 = arith.constant 224 : index
    %268 = vector.load %arg7[%c2_182, %c0_183, %c224_184] : memref<3x16x384xf32, #tpu.memory_space<vmem>>, vector<1x16x16xf32>
    %269 = vector.shape_cast %268 : vector<1x16x16xf32> to vector<16x16xf32>
    %270 = vector.shape_cast %267 : vector<16x16xf32> to vector<1x16x16xf32>
    tpu.vector_store %arg7[%c2_182, %c0_183, %c224_184], %270 {strides = array<i32>} : memref<3x16x384xf32, #tpu.memory_space<vmem>>, vector<1x16x16xf32>,
    %271 = vector.extract_strided_slice %7 {offsets = [240, 32], sizes = [16, 16], strides = [1, 1]} : vector<384x48xf32> to vector<16x16xf32>
    %c2_185 = arith.constant 2 : index
    %c0_186 = arith.constant 0 : index
    %c240_187 = arith.constant 240 : index
    %272 = vector.load %arg7[%c2_185, %c0_186, %c240_187] : memref<3x16x384xf32, #tpu.memory_space<vmem>>, vector<1x16x16xf32>
    %273 = vector.shape_cast %272 : vector<1x16x16xf32> to vector<16x16xf32>
    %274 = vector.shape_cast %271 : vector<16x16xf32> to vector<1x16x16xf32>
    tpu.vector_store %arg7[%c2_185, %c0_186, %c240_187], %274 {strides = array<i32>} : memref<3x16x384xf32, #tpu.memory_space<vmem>>, vector<1x16x16xf32>,
    %275 = vector.extract_strided_slice %7 {offsets = [256, 32], sizes = [16, 16], strides = [1, 1]} : vector<384x48xf32> to vector<16x16xf32>
    %c2_188 = arith.constant 2 : index
    %c0_189 = arith.constant 0 : index
    %c256_190 = arith.constant 256 : index
    %276 = vector.load %arg7[%c2_188, %c0_189, %c256_190] : memref<3x16x384xf32, #tpu.memory_space<vmem>>, vector<1x16x16xf32>
    %277 = vector.shape_cast %276 : vector<1x16x16xf32> to vector<16x16xf32>
    %278 = vector.shape_cast %275 : vector<16x16xf32> to vector<1x16x16xf32>
    tpu.vector_store %arg7[%c2_188, %c0_189, %c256_190], %278 {strides = array<i32>} : memref<3x16x384xf32, #tpu.memory_space<vmem>>, vector<1x16x16xf32>,
    %279 = vector.extract_strided_slice %7 {offsets = [272, 32], sizes = [16, 16], strides = [1, 1]} : vector<384x48xf32> to vector<16x16xf32>
    %c2_191 = arith.constant 2 : index
    %c0_192 = arith.constant 0 : index
    %c272_193 = arith.constant 272 : index
    %280 = vector.load %arg7[%c2_191, %c0_192, %c272_193] : memref<3x16x384xf32, #tpu.memory_space<vmem>>, vector<1x16x16xf32>
    %281 = vector.shape_cast %280 : vector<1x16x16xf32> to vector<16x16xf32>
    %282 = vector.shape_cast %279 : vector<16x16xf32> to vector<1x16x16xf32>
    tpu.vector_store %arg7[%c2_191, %c0_192, %c272_193], %282 {strides = array<i32>} : memref<3x16x384xf32, #tpu.memory_space<vmem>>, vector<1x16x16xf32>,
    %283 = vector.extract_strided_slice %7 {offsets = [288, 32], sizes = [16, 16], strides = [1, 1]} : vector<384x48xf32> to vector<16x16xf32>
    %c2_194 = arith.constant 2 : index
    %c0_195 = arith.constant 0 : index
    %c288_196 = arith.constant 288 : index
    %284 = vector.load %arg7[%c2_194, %c0_195, %c288_196] : memref<3x16x384xf32, #tpu.memory_space<vmem>>, vector<1x16x16xf32>
    %285 = vector.shape_cast %284 : vector<1x16x16xf32> to vector<16x16xf32>
    %286 = vector.shape_cast %283 : vector<16x16xf32> to vector<1x16x16xf32>
    tpu.vector_store %arg7[%c2_194, %c0_195, %c288_196], %286 {strides = array<i32>} : memref<3x16x384xf32, #tpu.memory_space<vmem>>, vector<1x16x16xf32>,
    %287 = vector.extract_strided_slice %7 {offsets = [304, 32], sizes = [16, 16], strides = [1, 1]} : vector<384x48xf32> to vector<16x16xf32>
    %c2_197 = arith.constant 2 : index
    %c0_198 = arith.constant 0 : index
    %c304_199 = arith.constant 304 : index
    %288 = vector.load %arg7[%c2_197, %c0_198, %c304_199] : memref<3x16x384xf32, #tpu.memory_space<vmem>>, vector<1x16x16xf32>
    %289 = vector.shape_cast %288 : vector<1x16x16xf32> to vector<16x16xf32>
    %290 = vector.shape_cast %287 : vector<16x16xf32> to vector<1x16x16xf32>
    tpu.vector_store %arg7[%c2_197, %c0_198, %c304_199], %290 {strides = array<i32>} : memref<3x16x384xf32, #tpu.memory_space<vmem>>, vector<1x16x16xf32>,
    %291 = vector.extract_strided_slice %7 {offsets = [320, 32], sizes = [16, 16], strides = [1, 1]} : vector<384x48xf32> to vector<16x16xf32>
    %c2_200 = arith.constant 2 : index
    %c0_201 = arith.constant 0 : index
    %c320_202 = arith.constant 320 : index
    %292 = vector.load %arg7[%c2_200, %c0_201, %c320_202] : memref<3x16x384xf32, #tpu.memory_space<vmem>>, vector<1x16x16xf32>
    %293 = vector.shape_cast %292 : vector<1x16x16xf32> to vector<16x16xf32>
    %294 = vector.shape_cast %291 : vector<16x16xf32> to vector<1x16x16xf32>
    tpu.vector_store %arg7[%c2_200, %c0_201, %c320_202], %294 {strides = array<i32>} : memref<3x16x384xf32, #tpu.memory_space<vmem>>, vector<1x16x16xf32>,
    %295 = vector.extract_strided_slice %7 {offsets = [336, 32], sizes = [16, 16], strides = [1, 1]} : vector<384x48xf32> to vector<16x16xf32>
    %c2_203 = arith.constant 2 : index
    %c0_204 = arith.constant 0 : index
    %c336_205 = arith.constant 336 : index
    %296 = vector.load %arg7[%c2_203, %c0_204, %c336_205] : memref<3x16x384xf32, #tpu.memory_space<vmem>>, vector<1x16x16xf32>
    %297 = vector.shape_cast %296 : vector<1x16x16xf32> to vector<16x16xf32>
    %298 = vector.shape_cast %295 : vector<16x16xf32> to vector<1x16x16xf32>
    tpu.vector_store %arg7[%c2_203, %c0_204, %c336_205], %298 {strides = array<i32>} : memref<3x16x384xf32, #tpu.memory_space<vmem>>, vector<1x16x16xf32>,
    %299 = vector.extract_strided_slice %7 {offsets = [352, 32], sizes = [16, 16], strides = [1, 1]} : vector<384x48xf32> to vector<16x16xf32>
    %c2_206 = arith.constant 2 : index
    %c0_207 = arith.constant 0 : index
    %c352_208 = arith.constant 352 : index
    %300 = vector.load %arg7[%c2_206, %c0_207, %c352_208] : memref<3x16x384xf32, #tpu.memory_space<vmem>>, vector<1x16x16xf32>
    %301 = vector.shape_cast %300 : vector<1x16x16xf32> to vector<16x16xf32>
    %302 = vector.shape_cast %299 : vector<16x16xf32> to vector<1x16x16xf32>
    tpu.vector_store %arg7[%c2_206, %c0_207, %c352_208], %302 {strides = array<i32>} : memref<3x16x384xf32, #tpu.memory_space<vmem>>, vector<1x16x16xf32>,
    %303 = vector.extract_strided_slice %7 {offsets = [368, 32], sizes = [16, 16], strides = [1, 1]} : vector<384x48xf32> to vector<16x16xf32>
    %c2_209 = arith.constant 2 : index
    %c0_210 = arith.constant 0 : index
    %c368_211 = arith.constant 368 : index
    %304 = vector.load %arg7[%c2_209, %c0_210, %c368_211] : memref<3x16x384xf32, #tpu.memory_space<vmem>>, vector<1x16x16xf32>
    %305 = vector.shape_cast %304 : vector<1x16x16xf32> to vector<16x16xf32>
    %306 = vector.shape_cast %303 : vector<16x16xf32> to vector<1x16x16xf32>
    tpu.vector_store %arg7[%c2_209, %c0_210, %c368_211], %306 {strides = array<i32>} : memref<3x16x384xf32, #tpu.memory_space<vmem>>, vector<1x16x16xf32>,
    %c2_212 = arith.constant 2 : index
    %c0_213 = arith.constant 0 : index
    %c0_214 = arith.constant 0 : index
    %307 = vector.load %arg5[%c2_212, %c0_213, %c0_214] : memref<3x16x16xf32, #tpu.memory_space<vmem>>, vector<1x16x16xf32>
    %308 = vector.shape_cast %307 : vector<1x16x16xf32> to vector<16x16xf32>
    %c2_215 = arith.constant 2 : index
    %c0_216 = arith.constant 0 : index
    %c0_217 = arith.constant 0 : index
    %309 = vector.load %arg7[%c2_215, %c0_216, %c0_217] : memref<3x16x384xf32, #tpu.memory_space<vmem>>, vector<1x16x384xf32>
    %310 = vector.shape_cast %309 : vector<1x16x384xf32> to vector<16x384xf32>
    %cst_218 = arith.constant dense<0.000000e+00> : vector<16x384xf32>
    %311 = tpu.matmul %308, %310, %cst_218 {dimension_numbers = #tpu.dot_dimension_numbers<[1], [0], [0], [1], [0, 0, 1, 1], [], []>} : vector<16x16xf32>, vector<16x384xf32>, vector<16x384xf32> -> vector<16x384xf32>
    %312 = arith.addf %210, %311 : vector<16x384xf32>
    %c0_219 = arith.constant 0 : index
    %c0_220 = arith.constant 0 : index
    %c0_221 = arith.constant 0 : index
    %c0_222 = arith.constant 0 : index
    %313 = vector.load %arg6[%c0_219, %c0_220, %c0_221, %c0_222] : memref<1x1x16x384xf32, #tpu.memory_space<vmem>>, vector<1x1x16x384xf32>
    %314 = vector.shape_cast %313 : vector<1x1x16x384xf32> to vector<16x384xf32>
    %315 = vector.shape_cast %312 : vector<16x384xf32> to vector<1x1x16x384xf32>
    tpu.vector_store %arg6[%c0_219, %c0_220, %c0_221, %c0_222], %315 {strides = array<i32>} : memref<1x1x16x384xf32, #tpu.memory_space<vmem>>, vector<1x1x16x384xf32>,
    return
  }
  func.func @transform_0(%arg0: i32, %arg1: i32) -> (i32, i32, i32, i32) {
    %c0_i32 = arith.constant 0 : i32
    %c0_i32_0 = arith.constant 0 : i32
    %c0_i32_1 = arith.constant 0 : i32
    return %arg0, %arg1, %c0_i32, %c0_i32_0 : i32, i32, i32, i32
  }
  func.func @transform_1(%arg0: i32, %arg1: i32) -> (i32, i32) {
    %c0_i32 = arith.constant 0 : i32
    %c0_i32_0 = arith.constant 0 : i32
    %c0_i32_1 = arith.constant 0 : i32
    return %c0_i32, %c0_i32_0 : i32, i32
  }
  func.func @transform_2(%arg0: i32, %arg1: i32) -> (i32, i32) {
    %c0_i32 = arith.constant 0 : i32
    %c0_i32_0 = arith.constant 0 : i32
    %c0_i32_1 = arith.constant 0 : i32
    return %c0_i32, %c0_i32_0 : i32, i32
  }
  func.func @transform_3(%arg0: i32, %arg1: i32) -> (i32, i32, i32) {
    %c0_i32 = arith.constant 0 : i32
    %c0_i32_0 = arith.constant 0 : i32
    %c0_i32_1 = arith.constant 0 : i32
    %c0_i32_2 = arith.constant 0 : i32
    return %c0_i32, %c0_i32_0, %c0_i32_1 : i32, i32, i32
  }
  func.func @transform_4(%arg0: i32, %arg1: i32) -> (i32, i32, i32, i32) {
    %c0_i32 = arith.constant 0 : i32
    %c0_i32_0 = arith.constant 0 : i32
    %c0_i32_1 = arith.constant 0 : i32
    return %arg0, %arg1, %c0_i32, %c0_i32_0 : i32, i32, i32, i32
  }
}

</mosaic_0001>

<llo_original>
// kernel: tpu_custom_call.1
$region0: #{tpu_custom_call.1}
  #allocation0 [shape = 'u32[]', space=smem, size = 0x4, offset = 0x4, fixed_abs, tag = 'smem constant byte address 0x4 - core index']
  #allocation1 [shape = 'u32[144,128]{1,0:T(1,128)}', space=vmem, size = 0x12000, scoped, tag = 'internal scratch']
  #allocation2 [shape = 'f32[3,16,384]{2,1,0:T(8,128)}', space=vmem, size = 0x12000, scoped, tag = 'scratch operand']
  %s0 = inlined_call_operand.vmem [shape: f32[2,24,16,8], index: 0, kind: input, shape index: {}]
  %s1 = inlined_call_operand.vmem [shape: f32[8,48], index: 1, kind: input, shape index: {}]
  %s2 = inlined_call_operand.vmem [shape: f32[1,48], index: 2, kind: input, shape index: {}]
  %s3 = inlined_call_operand.vmem [shape: f32[3,16,16], index: 3, kind: input, shape index: {}]
  %s4 = inlined_call_operand.hbm [shape: f32[2,1,16,384], index: 4, kind: output, shape index: {}]
  %s5 = sld [smem:[#allocation0]]
  $region49: #{tpu_custom_call.1} parent=0
    _
  %s7 = ssub.s32 1, %s5
  %s8 = scalar_select 0, %s7, %s5
  $region1: #{tpu_custom_call.1} parent=0
    #allocation3 [shape = 'u8[49152]{0}', space=vmem, size = 0xc000, scoped, tag = 'output window, operand 0']
    #allocation4 [shape = 's32[2]{0}', space=sflag, size = 0x8, scoped, tag = 'scoped memory for tpu_custom_call.1']
    %9 = vsyncpa [#allocation4], 0
    %s10 = scalar_lea.sflag [#allocation4], 1
    %11 = vsyncpa %s10, 0
    loop: start=0, step=1, limit=4
    $region2: #{tpu_custom_call.1} parent=1 // loop_pre_header
      _
    $region3: #{tpu_custom_call.1} parent=1 // loop_header
      %s13 = sphi 0, %s17
      %p14 = scmp.ge.s32.totalorder %s13, 4
      %s20 = sphi 0, %s32
      %s21 = sphi 0, %s28
      %s22 = sphi 0, %s20
      %s23 = sphi 0, %s21
      %s24 = sphi 0, %s22
      %s25 = sphi 0, %s23
      %s37 = sphi 0, %s39
      %s40 = sphi 0, %s37
      %s41 = sphi 0, %s40
      %s57 = sphi 0, %s41
      %s61 = sphi 0, %s61
      %s63 = sphi 0, %s61
      %s64 = sphi 0, %s63
      %s78 = sphi 0, %s64
      %s82 = sphi 0, %s82
      %s84 = sphi 0, %s82
      %s85 = sphi 0, %s84
      %s99 = sphi 0, %s85
      %s103 = sphi 0, %s103
      %s105 = sphi 0, %s103
      %s106 = sphi 0, %s105
      %s120 = sphi 0, %s106
      %s128 = sphi 0, %s130
      %s131 = sphi 0, %s128
      %s132 = sphi 0, %s131
      %s148 = sphi 0, %s132
    $region4: #{tpu_custom_call.1} parent=1 // loop_header_branch
      %16 = sbr.rel (%p14) target = $region8
    $region5: #{tpu_custom_call.1} parent=1 // loop_body
      %s18 = ssub.s32 %s13, 1
      %s19 = ssub.s32 %s13, 2
      %s26 = sadd.s32 1, %s21
      %p27 = scmp.ge.s32.totalorder %s26, 1
      %s28 = scalar_select %p27, 0, %s26
      %s29 = sadd.s32 1, %s20
      %s30 = scalar_select %p27, %s29, %s20
      %p31 = scmp.ge.s32.totalorder %s30, 2
      %s32 = scalar_select %p31, 0, %s30
      %s33 = ssub.s32 %s20, %s32
      %s34 = ssub.s32 %s21, %s28
      %s35 = sor.u32 %s33, %s34
      %p36 = scmp.eq.s32.totalorder %s35, 0
      %s38 = sadd.s32 %s37, 1
      %s39 = scalar_select %p36, %s37, %s38
      %p42 = pneg %p36
      %p43 = scmp.eq.s32.totalorder %s13, 1
      %p44 = por %p42, %p43
      %p45 = scmp.ne.s32.totalorder %s37, %s40
      %p46 = scmp.eq.s32.totalorder %s13, 0
      %p47 = por %p45, %p46
      %p48 = scmp.ne.s32.totalorder %s37, %s40
      %p49 = scmp.eq.s32.totalorder %s18, 1
      %p50 = por %p48, %p49
      %p51 = scmp.ne.s32.totalorder %s40, %s41
      %p52 = scmp.eq.s32.totalorder %s18, 0
      %p53 = por %p51, %p52
      %p54 = scmp.ne.s32.totalorder %s40, %s41
      %p55 = scmp.eq.s32.totalorder %s19, 1
      %p56 = por %p54, %p55
      %p58 = scmp.ne.s32.totalorder %s41, %s57
      %p59 = scmp.eq.s32.totalorder %s19, 0
      %p60 = por %p58, %p59
      %s62 = sadd.s32 %s61, 1
      %p65 = scmp.eq.s32.totalorder %s13, 1
      %p66 = scmp.ne.s32.totalorder %s61, %s63
      %p67 = scmp.eq.s32.totalorder %s13, 0
      %p68 = por %p66, %p67
      %p69 = scmp.ne.s32.totalorder %s61, %s63
      %p70 = scmp.eq.s32.totalorder %s18, 1
      %p71 = por %p69, %p70
      %p72 = scmp.ne.s32.totalorder %s63, %s64
      %p73 = scmp.eq.s32.totalorder %s18, 0
      %p74 = por %p72, %p73
      %p75 = scmp.ne.s32.totalorder %s63, %s64
      %p76 = scmp.eq.s32.totalorder %s19, 1
      %p77 = por %p75, %p76
      %p79 = scmp.ne.s32.totalorder %s64, %s78
      %p80 = scmp.eq.s32.totalorder %s19, 0
      %p81 = por %p79, %p80
      %s83 = sadd.s32 %s82, 1
      %p86 = scmp.eq.s32.totalorder %s13, 1
      %p87 = scmp.ne.s32.totalorder %s82, %s84
      %p88 = scmp.eq.s32.totalorder %s13, 0
      %p89 = por %p87, %p88
      %p90 = scmp.ne.s32.totalorder %s82, %s84
      %p91 = scmp.eq.s32.totalorder %s18, 1
      %p92 = por %p90, %p91
      %p93 = scmp.ne.s32.totalorder %s84, %s85
      %p94 = scmp.eq.s32.totalorder %s18, 0
      %p95 = por %p93, %p94
      %p96 = scmp.ne.s32.totalorder %s84, %s85
      %p97 = scmp.eq.s32.totalorder %s19, 1
      %p98 = por %p96, %p97
      %p100 = scmp.ne.s32.totalorder %s85, %s99
      %p101 = scmp.eq.s32.totalorder %s19, 0
      %p102 = por %p100, %p101
      %s104 = sadd.s32 %s103, 1
      %p107 = scmp.eq.s32.totalorder %s13, 1
      %p108 = scmp.ne.s32.totalorder %s103, %s105
      %p109 = scmp.eq.s32.totalorder %s13, 0
      %p110 = por %p108, %p109
      %p111 = scmp.ne.s32.totalorder %s103, %s105
      %p112 = scmp.eq.s32.totalorder %s18, 1
      %p113 = por %p111, %p112
      %p114 = scmp.ne.s32.totalorder %s105, %s106
      %p115 = scmp.eq.s32.totalorder %s18, 0
      %p116 = por %p114, %p115
      %p117 = scmp.ne.s32.totalorder %s105, %s106
      %p118 = scmp.eq.s32.totalorder %s19, 1
      %p119 = por %p117, %p118
      %p121 = scmp.ne.s32.totalorder %s106, %s120
      %p122 = scmp.eq.s32.totalorder %s19, 0
      %p123 = por %p121, %p122
      %s124 = ssub.s32 %s20, %s32
      %s125 = ssub.s32 %s21, %s28
      %s126 = sor.u32 %s124, %s125
      %p127 = scmp.eq.s32.totalorder %s126, 0
      %s129 = sadd.s32 %s128, 1
      %s130 = scalar_select %p127, %s128, %s129
      %p133 = pneg %p127
      %p134 = scmp.eq.s32.totalorder %s13, 1
      %p135 = por %p133, %p134
      %p136 = scmp.ne.s32.totalorder %s128, %s131
      %p137 = scmp.eq.s32.totalorder %s13, 0
      %p138 = por %p136, %p137
      %p139 = scmp.ne.s32.totalorder %s128, %s131
      %p140 = scmp.eq.s32.totalorder %s18, 1
      %p141 = por %p139, %p140
      %p142 = scmp.ne.s32.totalorder %s131, %s132
      %p143 = scmp.eq.s32.totalorder %s18, 0
      %p144 = por %p142, %p143
      %p145 = scmp.ne.s32.totalorder %s131, %s132
      %p146 = scmp.eq.s32.totalorder %s19, 1
      %p147 = por %p145, %p146
      %p149 = scmp.ne.s32.totalorder %s132, %s148
      %p150 = scmp.eq.s32.totalorder %s19, 0
      %p151 = por %p149, %p150
      %p152 = scmp.le.s32.totalorder 1, %s13
      %p153 = scmp.lt.s32.totalorder %s13, 3
      %p154 = pnand %p152, %p153
      %p155 = pneg %p154
      // Predicated region
      $region9: #{tpu_custom_call.1} parent=5 // pred_check
        _
      $region10: #{tpu_custom_call.1} parent=5 // pred_check_branch
        %157 = sbr.rel (%p154) target = $region12
      $region11: #{tpu_custom_call.1} parent=5 // pred_region
        %s158 = ssub.s32 %s13, 1
        // Predicated region
        $region13: #{tpu_custom_call.1} parent=11 // pred_check
          %p159 = pneg %p74
        $region14: #{tpu_custom_call.1} parent=11 // pred_check_branch
          %161 = sbr.rel (%p159) target = $region16
        $region15: #{tpu_custom_call.1} parent=11 // pred_region
          _
        $region16: #{tpu_custom_call.1} parent=11 // pred_fallthru
          _
        // Predicated region
        $region17: #{tpu_custom_call.1} parent=11 // pred_check
          %p162 = pneg %p95
        $region18: #{tpu_custom_call.1} parent=11 // pred_check_branch
          %164 = sbr.rel (%p162) target = $region20
        $region19: #{tpu_custom_call.1} parent=11 // pred_region
          _
        $region20: #{tpu_custom_call.1} parent=11 // pred_fallthru
          _
        // Predicated region
        $region21: #{tpu_custom_call.1} parent=11 // pred_check
          %p165 = pneg %p116
        $region22: #{tpu_custom_call.1} parent=11 // pred_check_branch
          %167 = sbr.rel (%p165) target = $region24
        $region23: #{tpu_custom_call.1} parent=11 // pred_region
          _
        $region24: #{tpu_custom_call.1} parent=11 // pred_fallthru
          _
      $region12: #{tpu_custom_call.1} parent=5 // pred_fallthru
        _
      %p168 = scmp.lt.s32.totalorder %s13, 2
      // Predicated region
      $region25: #{tpu_custom_call.1} parent=5 // pred_check
        %p169 = pneg %p168
      $region26: #{tpu_custom_call.1} parent=5 // pred_check_branch
        %171 = sbr.rel (%p169) target = $region28
      $region27: #{tpu_custom_call.1} parent=5 // pred_region
        // Predicated region
        $region29: #{tpu_custom_call.1} parent=27 // pred_check
          %p172 = pneg %p47
        $region30: #{tpu_custom_call.1} parent=27 // pred_check_branch
          %174 = sbr.rel (%p172) target = $region32
        $region31: #{tpu_custom_call.1} parent=27 // pred_region
          %s175 = smul.u32 24, %s21
          %p176 = scmp.lt.s32.totalorder %s20, 1
          %s177 = scalar_select %p176, %s20, 1
          %p178 = scmp.lt.s32.totalorder %s175, 23
          %s179 = scalar_select %p178, %s175, 23
          %s180 = smul.addr %s179, 2
          %s181 = smul.addr %s177, 48
          %s182 = sadd.s32 %s180, %s181
          %s183 = smul.addr %s182, 8
          %s184 = scalar_lea.vmem %s0, %s183
          %s185 = smul.u32 24, %s21
        $region32: #{tpu_custom_call.1} parent=27 // pred_fallthru
          _
      $region28: #{tpu_custom_call.1} parent=5 // pred_fallthru
        _
      %p186 = scmp.le.s32.totalorder 1, %s13
      %p187 = scmp.lt.s32.totalorder %s13, 3
      %p188 = pnand %p186, %p187
      %p189 = pneg %p188
      // Predicated region
      $region33: #{tpu_custom_call.1} parent=5 // pred_check
        _
      $region34: #{tpu_custom_call.1} parent=5 // pred_check_branch
        %191 = sbr.rel (%p188) target = $region36
      $region35: #{tpu_custom_call.1} parent=5 // pred_region
        %s192 = ssub.s32 %s13, 1
        %s193 = smul.u32 24, %s23
        %p194 = scmp.lt.s32.totalorder %s22, 1
        %s195 = scalar_select %p194, %s22, 1
        %p196 = scmp.lt.s32.totalorder %s193, 23
        %s197 = scalar_select %p196, %s193, 23
        %s198 = smul.addr %s197, 2
        %s199 = smul.addr %s195, 48
        %s200 = sadd.s32 %s198, %s199
        %s201 = smul.addr %s200, 8
        %s202 = scalar_lea.vmem %s0, %s201
        %p203 = pneg %p53
        %p204 = pneg %p50
        %p205 = pneg %p74
        %p206 = pneg %p71
        %p207 = pneg %p95
        %p208 = pneg %p92
        %p209 = pneg %p116
        %p210 = pneg %p113
        %p211 = pneg %p144
        %p212 = pneg %p141
        %s213 = sand.u32 %s131, 1
        %s214 = scalar_lea.sflag [#allocation4], %s213
        %s215 = sand.u32 %s131, 1
        %s216 = smul.addr %s215, 48
        %s217 = scalar_lea.vmem [#allocation3], %s216
        %s218 = smul.u32 24, %s23
        %p219 = scmp.lt.s32.totalorder %s22, 1
        %s220 = scalar_select %p219, %s22, 1
        %p221 = scmp.lt.s32.totalorder %s218, 23
        %s222 = scalar_select %p221, %s218, 23
        %s223 = smul.addr %s222, 2
        %s224 = smul.addr %s220, 48
        %s225 = sadd.s32 %s223, %s224
        %s226 = smul.addr %s225, 8
        %s227 = scalar_lea.vmem %s0, %s226
        %s228 = smul.u32 24, %s23
        %v229 = vld [vmem:[%s227] sm:$0xff]
        %v230 = vld [vmem:[%s227 + $0x8] sm:$0xff]
        %v231 = vld [vmem:[%s227 + $0x10] sm:$0xff]
        %v232 = vld [vmem:[%s227 + $0x18] sm:$0xff]
        %v233 = vld [vmem:[%s227 + $0x20] sm:$0xff]
        %v234 = vld [vmem:[%s227 + $0x28] sm:$0xff]
        %v235 = vld [vmem:[%s227 + $0x30] sm:$0xff]
        %v236 = vld [vmem:[%s227 + $0x38] sm:$0xff]
        %v237 = vld [vmem:[%s227 + $0x40] sm:$0xff]
        %v238 = vld [vmem:[%s227 + $0x48] sm:$0xff]
        %v239 = vld [vmem:[%s227 + $0x50] sm:$0xff]
        %v240 = vld [vmem:[%s227 + $0x58] sm:$0xff]
        %v241 = vld [vmem:[%s227 + $0x60] sm:$0xff]
        %v242 = vld [vmem:[%s227 + $0x68] sm:$0xff]
        %v243 = vld [vmem:[%s227 + $0x70] sm:$0xff]
        %v244 = vld [vmem:[%s227 + $0x78] sm:$0xff]
        %v245 = vld [vmem:[%s227 + $0x80] sm:$0xff]
        %v246 = vld [vmem:[%s227 + $0x88] sm:$0xff]
        %v247 = vld [vmem:[%s227 + $0x90] sm:$0xff]
        %v248 = vld [vmem:[%s227 + $0x98] sm:$0xff]
        %v249 = vld [vmem:[%s227 + $0xa0] sm:$0xff]
        %v250 = vld [vmem:[%s227 + $0xa8] sm:$0xff]
        %v251 = vld [vmem:[%s227 + $0xb0] sm:$0xff]
        %v252 = vld [vmem:[%s227 + $0xb8] sm:$0xff]
        %v253 = vld [vmem:[%s227 + $0xc0] sm:$0xff]
        %v254 = vld [vmem:[%s227 + $0xc8] sm:$0xff]
        %v255 = vld [vmem:[%s227 + $0xd0] sm:$0xff]
        %v256 = vld [vmem:[%s227 + $0xd8] sm:$0xff]
        %v257 = vld [vmem:[%s227 + $0xe0] sm:$0xff]
        %v258 = vld [vmem:[%s227 + $0xe8] sm:$0xff]
        %v259 = vld [vmem:[%s227 + $0xf0] sm:$0xff]
        %v260 = vld [vmem:[%s227 + $0xf8] sm:$0xff]
        %v261 = vld [vmem:[%s227 + $0x100] sm:$0xff]
        %v262 = vld [vmem:[%s227 + $0x108] sm:$0xff]
        %v263 = vld [vmem:[%s227 + $0x110] sm:$0xff]
        %v264 = vld [vmem:[%s227 + $0x118] sm:$0xff]
        %v265 = vld [vmem:[%s227 + $0x120] sm:$0xff]
        %v266 = vld [vmem:[%s227 + $0x128] sm:$0xff]
        %v267 = vld [vmem:[%s227 + $0x130] sm:$0xff]
        %v268 = vld [vmem:[%s227 + $0x138] sm:$0xff]
        %v269 = vld [vmem:[%s227 + $0x140] sm:$0xff]
        %v270 = vld [vmem:[%s227 + $0x148] sm:$0xff]
        %v271 = vld [vmem:[%s227 + $0x150] sm:$0xff]
        %v272 = vld [vmem:[%s227 + $0x158] sm:$0xff]
        %v273 = vld [vmem:[%s227 + $0x160] sm:$0xff]
        %v274 = vld [vmem:[%s227 + $0x168] sm:$0xff]
        %v275 = vld [vmem:[%s227 + $0x170] sm:$0xff]
        %v276 = vld [vmem:[%s227 + $0x178] sm:$0xff]
        %v277 = vld [vmem:[%s1] sm:$0xff]
        %v278 = vld [vmem:[%s2] sm:$0x1]
        %v280 = vlaneseq
        %v281 = vshrl.u32 %v280, 7
        %v282 = vsub.s32 0, %v281
        %v283 = vrot.slane %v278, %v282
        %vm285 = vcmask 64512
        %v287 = vsel %vm285, %v229, 0
        %v290 = vsel %vm285, %v230, 0
        %v293 = vsel %vm285, %v231, 0
        %v296 = vsel %vm285, %v232, 0
        %v299 = vsel %vm285, %v233, 0
        %v302 = vsel %vm285, %v234, 0
        %v305 = vsel %vm285, %v235, 0
        %v308 = vsel %vm285, %v236, 0
        %v311 = vsel %vm285, %v237, 0
        %v314 = vsel %vm285, %v238, 0
        %v317 = vsel %vm285, %v239, 0
        %v320 = vsel %vm285, %v240, 0
        %v323 = vsel %vm285, %v241, 0
        %v326 = vsel %vm285, %v242, 0
        %v329 = vsel %vm285, %v243, 0
        %v332 = vsel %vm285, %v244, 0
        %v335 = vsel %vm285, %v245, 0
        %v338 = vsel %vm285, %v246, 0
        %v341 = vsel %vm285, %v247, 0
        %v344 = vsel %vm285, %v248, 0
        %v347 = vsel %vm285, %v249, 0
        %v350 = vsel %vm285, %v250, 0
        %v353 = vsel %vm285, %v251, 0
        %v356 = vsel %vm285, %v252, 0
        %v359 = vsel %vm285, %v253, 0
        %v362 = vsel %vm285, %v254, 0
        %v365 = vsel %vm285, %v255, 0
        %v368 = vsel %vm285, %v256, 0
        %v371 = vsel %vm285, %v257, 0
        %v374 = vsel %vm285, %v258, 0
        %v377 = vsel %vm285, %v259, 0
        %v380 = vsel %vm285, %v260, 0
        %v383 = vsel %vm285, %v261, 0
        %v386 = vsel %vm285, %v262, 0
        %v389 = vsel %vm285, %v263, 0
        %v392 = vsel %vm285, %v264, 0
        %v395 = vsel %vm285, %v265, 0
        %v398 = vsel %vm285, %v266, 0
        %v401 = vsel %vm285, %v267, 0
        %v404 = vsel %vm285, %v268, 0
        %v407 = vsel %vm285, %v269, 0
        %v410 = vsel %vm285, %v270, 0
        %v413 = vsel %vm285, %v271, 0
        %v416 = vsel %vm285, %v272, 0
        %v419 = vsel %vm285, %v273, 0
        %v422 = vsel %vm285, %v274, 0
        %v425 = vsel %vm285, %v275, 0
        %v428 = vsel %vm285, %v276, 0
        %430 = vmatprep.subr.mxu0 0.0
        %431 = vmatpush1.msra.mxu0 %v277
        %432 = vmatprep.subr.mxu0 0.0
        %433 = vmatpush1.msra.mxu0 0.0
        %434 = vmatprep.subr.mxu0 0.0
        %435 = vmatpush1.msra.mxu0 0.0
        %436 = vmatprep.subr.mxu0 0.0
        %437 = vmatpush1.msra.mxu0 0.0
        %438 = vmatprep.subr.mxu0 0.0
        %439 = vmatpush1.msra.mxu0 0.0
        %440 = vmatprep.subr.mxu0 0.0
        %441 = vmatpush1.msra.mxu0 0.0
        %442 = vmatprep.subr.mxu0 0.0
        %443 = vmatpush1.msra.mxu0 0.0
        %444 = vmatprep.subr.mxu0 0.0
        %445 = vmatpush1.msra.mxu0 0.0
        %446 = vmatprep.subr.mxu0 0.0
        %447 = vmatpush1.msra.mxu0 0.0
        %448 = vmatprep.subr.mxu0 0.0
        %449 = vmatpush1.msra.mxu0 0.0
        %450 = vmatprep.subr.mxu0 0.0
        %451 = vmatpush1.msra.mxu0 0.0
        %452 = vmatprep.subr.mxu0 0.0
        %453 = vmatpush1.msra.mxu0 0.0
        %454 = vmatprep.subr.mxu0 0.0
        %455 = vmatpush1.msra.mxu0 0.0
        %456 = vmatprep.subr.mxu0 0.0
        %457 = vmatpush1.msra.mxu0 0.0
        %458 = vmatprep.subr.mxu0 0.0
        %459 = vmatpush1.msra.mxu0 0.0
        %460 = vmatprep.subr.mxu0 0.0
        %461 = vmatpush1.msra.mxu0 0.0
        %462 = vmatprep.subr.mxu0 0.0
        %463 = vmatpush1.msra.mxu0 0.0
        %464 = vmatprep.subr.mxu0 0.0
        %465 = vmatpush1.msra.mxu0 0.0
        %466 = vmatprep.subr.mxu0 0.0
        %467 = vmatpush1.msra.mxu0 0.0
        %468 = vmatprep.subr.mxu0 0.0
        %469 = vmatpush1.msra.mxu0 0.0
        %470 = vmatprep.subr.mxu0 0.0
        %471 = vmatpush1.msra.mxu0 0.0
        %472 = vmatprep.subr.mxu0 0.0
        %473 = vmatpush1.msra.mxu0 0.0
        %474 = vmatprep.subr.mxu0 0.0
        %475 = vmatpush1.msra.mxu0 0.0
        %476 = vmatprep.subr.mxu0 0.0
        %477 = vmatpush1.msra.mxu0 0.0
        %478 = vmatprep.subr.mxu0 0.0
        %479 = vmatpush1.msra.mxu0 0.0
        %480 = vmatprep.subr.mxu0 0.0
        %481 = vmatpush1.msra.mxu0 0.0
        %482 = vmatprep.subr.mxu0 0.0
        %483 = vmatpush1.msra.mxu0 0.0
        %484 = vmatprep.subr.mxu0 0.0
        %485 = vmatpush1.msra.mxu0 0.0
        %486 = vmatprep.subr.mxu0 0.0
        %487 = vmatpush1.msra.mxu0 0.0
        %488 = vmatprep.subr.mxu0 0.0
        %489 = vmatpush1.msra.mxu0 0.0
        %490 = vmatprep.subr.mxu0 0.0
        %491 = vmatpush1.msra.mxu0 0.0
        %492 = vmatprep.subr.mxu0 0.0
        %493 = vmatpush1.msra.mxu0 0.0
        %494 = vmatprep.mubr.f32.mxu0 0.0
        %495 = vmatmul.mubr.f32.gmra.mrb[0].mxu0 %v287
        %v496 = vpop.f32.mrb[0].mxu0
        %v497 = vadd.f32 %v283, %v496
        %v498 = vpop.f32.mrb[0].mxu0
        %499 = vmatprep.mubr.f32.mxu0 0.0
        %500 = vmatmul.mubr.f32.gmra.mrb[0].mxu0 %v290
        %v501 = vpop.f32.mrb[0].mxu0
        %v502 = vadd.f32 %v283, %v501
        %v503 = vpop.f32.mrb[0].mxu0
        %504 = vmatprep.mubr.f32.mxu0 0.0
        %505 = vmatmul.mubr.f32.gmra.mrb[0].mxu0 %v293
        %v506 = vpop.f32.mrb[0].mxu0
        %v507 = vadd.f32 %v283, %v506
        %v508 = vpop.f32.mrb[0].mxu0
        %509 = vmatprep.mubr.f32.mxu0 0.0
        %510 = vmatmul.mubr.f32.gmra.mrb[0].mxu0 %v296
        %v511 = vpop.f32.mrb[0].mxu0
        %v512 = vadd.f32 %v283, %v511
        %v513 = vpop.f32.mrb[0].mxu0
        %514 = vmatprep.mubr.f32.mxu0 0.0
        %515 = vmatmul.mubr.f32.gmra.mrb[0].mxu0 %v299
        %v516 = vpop.f32.mrb[0].mxu0
        %v517 = vadd.f32 %v283, %v516
        %v518 = vpop.f32.mrb[0].mxu0
        %519 = vmatprep.mubr.f32.mxu0 0.0
        %520 = vmatmul.mubr.f32.gmra.mrb[0].mxu0 %v302
        %v521 = vpop.f32.mrb[0].mxu0
        %v522 = vadd.f32 %v283, %v521
        %v523 = vpop.f32.mrb[0].mxu0
        %524 = vmatprep.mubr.f32.mxu0 0.0
        %525 = vmatmul.mubr.f32.gmra.mrb[0].mxu0 %v305
        %v526 = vpop.f32.mrb[0].mxu0
        %v527 = vadd.f32 %v283, %v526
        %v528 = vpop.f32.mrb[0].mxu0
        %529 = vmatprep.mubr.f32.mxu0 0.0
        %530 = vmatmul.mubr.f32.gmra.mrb[0].mxu0 %v308
        %v531 = vpop.f32.mrb[0].mxu0
        %v532 = vadd.f32 %v283, %v531
        %v533 = vpop.f32.mrb[0].mxu0
        %534 = vmatprep.mubr.f32.mxu0 0.0
        %535 = vmatmul.mubr.f32.gmra.mrb[0].mxu0 %v311
        %v536 = vpop.f32.mrb[0].mxu0
        %v537 = vadd.f32 %v283, %v536
        %v538 = vpop.f32.mrb[0].mxu0
        %539 = vmatprep.mubr.f32.mxu0 0.0
        %540 = vmatmul.mubr.f32.gmra.mrb[0].mxu0 %v314
        %v541 = vpop.f32.mrb[0].mxu0
        %v542 = vadd.f32 %v283, %v541
        %v543 = vpop.f32.mrb[0].mxu0
        %544 = vmatprep.mubr.f32.mxu0 0.0
        %545 = vmatmul.mubr.f32.gmra.mrb[0].mxu0 %v317
        %v546 = vpop.f32.mrb[0].mxu0
        %v547 = vadd.f32 %v283, %v546
        %v548 = vpop.f32.mrb[0].mxu0
        %549 = vmatprep.mubr.f32.mxu0 0.0
        %550 = vmatmul.mubr.f32.gmra.mrb[0].mxu0 %v320
        %v551 = vpop.f32.mrb[0].mxu0
        %v552 = vadd.f32 %v283, %v551
        %v553 = vpop.f32.mrb[0].mxu0
        %554 = vmatprep.mubr.f32.mxu0 0.0
        %555 = vmatmul.mubr.f32.gmra.mrb[0].mxu0 %v323
        %v556 = vpop.f32.mrb[0].mxu0
        %v557 = vadd.f32 %v283, %v556
        %v558 = vpop.f32.mrb[0].mxu0
        %559 = vmatprep.mubr.f32.mxu0 0.0
        %560 = vmatmul.mubr.f32.gmra.mrb[0].mxu0 %v326
        %v561 = vpop.f32.mrb[0].mxu0
        %v562 = vadd.f32 %v283, %v561
        %v563 = vpop.f32.mrb[0].mxu0
        %564 = vmatprep.mubr.f32.mxu0 0.0
        %565 = vmatmul.mubr.f32.gmra.mrb[0].mxu0 %v329
        %v566 = vpop.f32.mrb[0].mxu0
        %v567 = vadd.f32 %v283, %v566
        %v568 = vpop.f32.mrb[0].mxu0
        %569 = vmatprep.mubr.f32.mxu0 0.0
        %570 = vmatmul.mubr.f32.gmra.mrb[0].mxu0 %v332
        %v571 = vpop.f32.mrb[0].mxu0
        %v572 = vadd.f32 %v283, %v571
        %v573 = vpop.f32.mrb[0].mxu0
        %574 = vmatprep.mubr.f32.mxu0 0.0
        %575 = vmatmul.mubr.f32.gmra.mrb[0].mxu0 %v335
        %v576 = vpop.f32.mrb[0].mxu0
        %v577 = vadd.f32 %v283, %v576
        %v578 = vpop.f32.mrb[0].mxu0
        %579 = vmatprep.mubr.f32.mxu0 0.0
        %580 = vmatmul.mubr.f32.gmra.mrb[0].mxu0 %v338
        %v581 = vpop.f32.mrb[0].mxu0
        %v582 = vadd.f32 %v283, %v581
        %v583 = vpop.f32.mrb[0].mxu0
        %584 = vmatprep.mubr.f32.mxu0 0.0
        %585 = vmatmul.mubr.f32.gmra.mrb[0].mxu0 %v341
        %v586 = vpop.f32.mrb[0].mxu0
        %v587 = vadd.f32 %v283, %v586
        %v588 = vpop.f32.mrb[0].mxu0
        %589 = vmatprep.mubr.f32.mxu0 0.0
        %590 = vmatmul.mubr.f32.gmra.mrb[0].mxu0 %v344
        %v591 = vpop.f32.mrb[0].mxu0
        %v592 = vadd.f32 %v283, %v591
        %v593 = vpop.f32.mrb[0].mxu0
        %594 = vmatprep.mubr.f32.mxu0 0.0
        %595 = vmatmul.mubr.f32.gmra.mrb[0].mxu0 %v347
        %v596 = vpop.f32.mrb[0].mxu0
        %v597 = vadd.f32 %v283, %v596
        %v598 = vpop.f32.mrb[0].mxu0
        %599 = vmatprep.mubr.f32.mxu0 0.0
        %600 = vmatmul.mubr.f32.gmra.mrb[0].mxu0 %v350
        %v601 = vpop.f32.mrb[0].mxu0
        %v602 = vadd.f32 %v283, %v601
        %v603 = vpop.f32.mrb[0].mxu0
        %604 = vmatprep.mubr.f32.mxu0 0.0
        %605 = vmatmul.mubr.f32.gmra.mrb[0].mxu0 %v353
        %v606 = vpop.f32.mrb[0].mxu0
        %v607 = vadd.f32 %v283, %v606
        %v608 = vpop.f32.mrb[0].mxu0
        %609 = vmatprep.mubr.f32.mxu0 0.0
        %610 = vmatmul.mubr.f32.gmra.mrb[0].mxu0 %v356
        %v611 = vpop.f32.mrb[0].mxu0
        %v612 = vadd.f32 %v283, %v611
        %v613 = vpop.f32.mrb[0].mxu0
        %614 = vmatprep.mubr.f32.mxu0 0.0
        %615 = vmatmul.mubr.f32.gmra.mrb[0].mxu0 %v359
        %v616 = vpop.f32.mrb[0].mxu0
        %v617 = vadd.f32 %v283, %v616
        %v618 = vpop.f32.mrb[0].mxu0
        %619 = vmatprep.mubr.f32.mxu0 0.0
        %620 = vmatmul.mubr.f32.gmra.mrb[0].mxu0 %v362
        %v621 = vpop.f32.mrb[0].mxu0
        %v622 = vadd.f32 %v283, %v621
        %v623 = vpop.f32.mrb[0].mxu0
        %624 = vmatprep.mubr.f32.mxu0 0.0
        %625 = vmatmul.mubr.f32.gmra.mrb[0].mxu0 %v365
        %v626 = vpop.f32.mrb[0].mxu0
        %v627 = vadd.f32 %v283, %v626
        %v628 = vpop.f32.mrb[0].mxu0
        %629 = vmatprep.mubr.f32.mxu0 0.0
        %630 = vmatmul.mubr.f32.gmra.mrb[0].mxu0 %v368
        %v631 = vpop.f32.mrb[0].mxu0
        %v632 = vadd.f32 %v283, %v631
        %v633 = vpop.f32.mrb[0].mxu0
        %634 = vmatprep.mubr.f32.mxu0 0.0
        %635 = vmatmul.mubr.f32.gmra.mrb[0].mxu0 %v371
        %v636 = vpop.f32.mrb[0].mxu0
        %v637 = vadd.f32 %v283, %v636
        %v638 = vpop.f32.mrb[0].mxu0
        %639 = vmatprep.mubr.f32.mxu0 0.0
        %640 = vmatmul.mubr.f32.gmra.mrb[0].mxu0 %v374
        %v641 = vpop.f32.mrb[0].mxu0
        %v642 = vadd.f32 %v283, %v641
        %v643 = vpop.f32.mrb[0].mxu0
        %644 = vmatprep.mubr.f32.mxu0 0.0
        %645 = vmatmul.mubr.f32.gmra.mrb[0].mxu0 %v377
        %v646 = vpop.f32.mrb[0].mxu0
        %v647 = vadd.f32 %v283, %v646
        %v648 = vpop.f32.mrb[0].mxu0
        %649 = vmatprep.mubr.f32.mxu0 0.0
        %650 = vmatmul.mubr.f32.gmra.mrb[0].mxu0 %v380
        %v651 = vpop.f32.mrb[0].mxu0
        %v652 = vadd.f32 %v283, %v651
        %v653 = vpop.f32.mrb[0].mxu0
        %654 = vmatprep.mubr.f32.mxu0 0.0
        %655 = vmatmul.mubr.f32.gmra.mrb[0].mxu0 %v383
        %v656 = vpop.f32.mrb[0].mxu0
        %v657 = vadd.f32 %v283, %v656
        %v658 = vpop.f32.mrb[0].mxu0
        %659 = vmatprep.mubr.f32.mxu0 0.0
        %660 = vmatmul.mubr.f32.gmra.mrb[0].mxu0 %v386
        %v661 = vpop.f32.mrb[0].mxu0
        %v662 = vadd.f32 %v283, %v661
        %v663 = vpop.f32.mrb[0].mxu0
        %664 = vmatprep.mubr.f32.mxu0 0.0
        %665 = vmatmul.mubr.f32.gmra.mrb[0].mxu0 %v389
        %v666 = vpop.f32.mrb[0].mxu0
        %v667 = vadd.f32 %v283, %v666
        %v668 = vpop.f32.mrb[0].mxu0
        %669 = vmatprep.mubr.f32.mxu0 0.0
        %670 = vmatmul.mubr.f32.gmra.mrb[0].mxu0 %v392
        %v671 = vpop.f32.mrb[0].mxu0
        %v672 = vadd.f32 %v283, %v671
        %v673 = vpop.f32.mrb[0].mxu0
        %674 = vmatprep.mubr.f32.mxu0 0.0
        %675 = vmatmul.mubr.f32.gmra.mrb[0].mxu0 %v395
        %v676 = vpop.f32.mrb[0].mxu0
        %v677 = vadd.f32 %v283, %v676
        %v678 = vpop.f32.mrb[0].mxu0
        %679 = vmatprep.mubr.f32.mxu0 0.0
        %680 = vmatmul.mubr.f32.gmra.mrb[0].mxu0 %v398
        %v681 = vpop.f32.mrb[0].mxu0
        %v682 = vadd.f32 %v283, %v681
        %v683 = vpop.f32.mrb[0].mxu0
        %684 = vmatprep.mubr.f32.mxu0 0.0
        %685 = vmatmul.mubr.f32.gmra.mrb[0].mxu0 %v401
        %v686 = vpop.f32.mrb[0].mxu0
        %v687 = vadd.f32 %v283, %v686
        %v688 = vpop.f32.mrb[0].mxu0
        %689 = vmatprep.mubr.f32.mxu0 0.0
        %690 = vmatmul.mubr.f32.gmra.mrb[0].mxu0 %v404
        %v691 = vpop.f32.mrb[0].mxu0
        %v692 = vadd.f32 %v283, %v691
        %v693 = vpop.f32.mrb[0].mxu0
        %694 = vmatprep.mubr.f32.mxu0 0.0
        %695 = vmatmul.mubr.f32.gmra.mrb[0].mxu0 %v407
        %v696 = vpop.f32.mrb[0].mxu0
        %v697 = vadd.f32 %v283, %v696
        %v698 = vpop.f32.mrb[0].mxu0
        %699 = vmatprep.mubr.f32.mxu0 0.0
        %700 = vmatmul.mubr.f32.gmra.mrb[0].mxu0 %v410
        %v701 = vpop.f32.mrb[0].mxu0
        %v702 = vadd.f32 %v283, %v701
        %v703 = vpop.f32.mrb[0].mxu0
        %704 = vmatprep.mubr.f32.mxu0 0.0
        %705 = vmatmul.mubr.f32.gmra.mrb[0].mxu0 %v413
        %v706 = vpop.f32.mrb[0].mxu0
        %v707 = vadd.f32 %v283, %v706
        %v708 = vpop.f32.mrb[0].mxu0
        %709 = vmatprep.mubr.f32.mxu0 0.0
        %710 = vmatmul.mubr.f32.gmra.mrb[0].mxu0 %v416
        %v711 = vpop.f32.mrb[0].mxu0
        %v712 = vadd.f32 %v283, %v711
        %v713 = vpop.f32.mrb[0].mxu0
        %714 = vmatprep.mubr.f32.mxu0 0.0
        %715 = vmatmul.mubr.f32.gmra.mrb[0].mxu0 %v419
        %v716 = vpop.f32.mrb[0].mxu0
        %v717 = vadd.f32 %v283, %v716
        %v718 = vpop.f32.mrb[0].mxu0
        %719 = vmatprep.mubr.f32.mxu0 0.0
        %720 = vmatmul.mubr.f32.gmra.mrb[0].mxu0 %v422
        %v721 = vpop.f32.mrb[0].mxu0
        %v722 = vadd.f32 %v283, %v721
        %v723 = vpop.f32.mrb[0].mxu0
        %724 = vmatprep.mubr.f32.mxu0 0.0
        %725 = vmatmul.mubr.f32.gmra.mrb[0].mxu0 %v425
        %v726 = vpop.f32.mrb[0].mxu0
        %v727 = vadd.f32 %v283, %v726
        %v728 = vpop.f32.mrb[0].mxu0
        %729 = vmatprep.mubr.f32.mxu0 0.0
        %730 = vmatmul.mubr.f32.gmra.mrb[0].mxu0 %v428
        %v731 = vpop.f32.mrb[0].mxu0
        %v732 = vadd.f32 %v283, %v731
        %v733 = vpop.f32.mrb[0].mxu0
        %734 = vdwg.mxu0
        %vm735 = vcmask 130048
        %736 = vst.msk [vmem:[#allocation2] sm:$0xff] %vm735, %v497
        %737 = vst.msk [vmem:[#allocation2 + $0x18] sm:$0xff] %vm735, %v502
        %740 = vrot.lane.b32.xlu0 %v507, 16
        %v741 = vpop.permute.xlu0 %740
        %742 = vrot.lane.b32.xlu0 %v512, 16
        %v743 = vpop.permute.xlu0 %742
        %vm746 = vcmask 261248
        %747 = vst.msk [vmem:[#allocation2] sm:$0xff] %vm746, %v741
        %748 = vst.msk [vmem:[#allocation2 + $0x18] sm:$0xff] %vm746, %v743
        %751 = vrot.lane.b32.xlu0 %v517, 32
        %v752 = vpop.permute.xlu0 %751
        %753 = vrot.lane.b32.xlu0 %v522, 32
        %v754 = vpop.permute.xlu0 %753
        %vm757 = vcmask 392448
        %758 = vst.msk [vmem:[#allocation2] sm:$0xff] %vm757, %v752
        %759 = vst.msk [vmem:[#allocation2 + $0x18] sm:$0xff] %vm757, %v754
        %762 = vrot.lane.b32.xlu0 %v527, 48
        %v763 = vpop.permute.xlu0 %762
        %764 = vrot.lane.b32.xlu0 %v532, 48
        %v765 = vpop.permute.xlu0 %764
        %vm768 = vcmask 523648
        %769 = vst.msk [vmem:[#allocation2] sm:$0xff] %vm768, %v763
        %770 = vst.msk [vmem:[#allocation2 + $0x18] sm:$0xff] %vm768, %v765
        %773 = vrot.lane.b32.xlu0 %v537, 64
        %v774 = vpop.permute.xlu0 %773
        %775 = vrot.lane.b32.xlu0 %v542, 64
        %v776 = vpop.permute.xlu0 %775
        %vm779 = vcmask 654848
        %780 = vst.msk [vmem:[#allocation2] sm:$0xff] %vm779, %v774
        %781 = vst.msk [vmem:[#allocation2 + $0x18] sm:$0xff] %vm779, %v776
        %784 = vrot.lane.b32.xlu0 %v547, 80
        %v785 = vpop.permute.xlu0 %784
        %786 = vrot.lane.b32.xlu0 %v552, 80
        %v787 = vpop.permute.xlu0 %786
        %vm790 = vcmask 786048
        %791 = vst.msk [vmem:[#allocation2] sm:$0xff] %vm790, %v785
        %792 = vst.msk [vmem:[#allocation2 + $0x18] sm:$0xff] %vm790, %v787
        %795 = vrot.lane.b32.xlu0 %v557, 96
        %v796 = vpop.permute.xlu0 %795
        %797 = vrot.lane.b32.xlu0 %v562, 96
        %v798 = vpop.permute.xlu0 %797
        %vm801 = vcmask 917248
        %802 = vst.msk [vmem:[#allocation2] sm:$0xff] %vm801, %v796
        %803 = vst.msk [vmem:[#allocation2 + $0x18] sm:$0xff] %vm801, %v798
        %806 = vrot.lane.b32.xlu0 %v567, 112
        %v807 = vpop.permute.xlu0 %806
        %808 = vrot.lane.b32.xlu0 %v572, 112
        %v809 = vpop.permute.xlu0 %808
        %vm812 = vcmask 1048448
        %813 = vst.msk [vmem:[#allocation2] sm:$0xff] %vm812, %v807
        %814 = vst.msk [vmem:[#allocation2 + $0x18] sm:$0xff] %vm812, %v809
        %815 = vst.msk [vmem:[#allocation2 + $0x8] sm:$0xff] %vm735, %v577
        %816 = vst.msk [vmem:[#allocation2 + $0x20] sm:$0xff] %vm735, %v582
        %819 = vrot.lane.b32.xlu0 %v587, 16
        %v820 = vpop.permute.xlu0 %819
        %821 = vrot.lane.b32.xlu0 %v592, 16
        %v822 = vpop.permute.xlu0 %821
        %825 = vst.msk [vmem:[#allocation2 + $0x8] sm:$0xff] %vm746, %v820
        %826 = vst.msk [vmem:[#allocation2 + $0x20] sm:$0xff] %vm746, %v822
        %829 = vrot.lane.b32.xlu0 %v597, 32
        %v830 = vpop.permute.xlu0 %829
        %831 = vrot.lane.b32.xlu0 %v602, 32
        %v832 = vpop.permute.xlu0 %831
        %835 = vst.msk [vmem:[#allocation2 + $0x8] sm:$0xff] %vm757, %v830
        %836 = vst.msk [vmem:[#allocation2 + $0x20] sm:$0xff] %vm757, %v832
        %839 = vrot.lane.b32.xlu0 %v607, 48
        %v840 = vpop.permute.xlu0 %839
        %841 = vrot.lane.b32.xlu0 %v612, 48
        %v842 = vpop.permute.xlu0 %841
        %845 = vst.msk [vmem:[#allocation2 + $0x8] sm:$0xff] %vm768, %v840
        %846 = vst.msk [vmem:[#allocation2 + $0x20] sm:$0xff] %vm768, %v842
        %849 = vrot.lane.b32.xlu0 %v617, 64
        %v850 = vpop.permute.xlu0 %849
        %851 = vrot.lane.b32.xlu0 %v622, 64
        %v852 = vpop.permute.xlu0 %851
        %855 = vst.msk [vmem:[#allocation2 + $0x8] sm:$0xff] %vm779, %v850
        %856 = vst.msk [vmem:[#allocation2 + $0x20] sm:$0xff] %vm779, %v852
        %859 = vrot.lane.b32.xlu0 %v627, 80
        %v860 = vpop.permute.xlu0 %859
        %861 = vrot.lane.b32.xlu0 %v632, 80
        %v862 = vpop.permute.xlu0 %861
        %865 = vst.msk [vmem:[#allocation2 + $0x8] sm:$0xff] %vm790, %v860
        %866 = vst.msk [vmem:[#allocation2 + $0x20] sm:$0xff] %vm790, %v862
        %869 = vrot.lane.b32.xlu0 %v637, 96
        %v870 = vpop.permute.xlu0 %869
        %871 = vrot.lane.b32.xlu0 %v642, 96
        %v872 = vpop.permute.xlu0 %871
        %875 = vst.msk [vmem:[#allocation2 + $0x8] sm:$0xff] %vm801, %v870
        %876 = vst.msk [vmem:[#allocation2 + $0x20] sm:$0xff] %vm801, %v872
        %879 = vrot.lane.b32.xlu0 %v647, 112
        %v880 = vpop.permute.xlu0 %879
        %881 = vrot.lane.b32.xlu0 %v652, 112
        %v882 = vpop.permute.xlu0 %881
        %885 = vst.msk [vmem:[#allocation2 + $0x8] sm:$0xff] %vm812, %v880
        %886 = vst.msk [vmem:[#allocation2 + $0x20] sm:$0xff] %vm812, %v882
        %887 = vst.msk [vmem:[#allocation2 + $0x10] sm:$0xff] %vm735, %v657
        %888 = vst.msk [vmem:[#allocation2 + $0x28] sm:$0xff] %vm735, %v662
        %891 = vrot.lane.b32.xlu0 %v667, 16
        %v892 = vpop.permute.xlu0 %891
        %893 = vrot.lane.b32.xlu0 %v672, 16
        %v894 = vpop.permute.xlu0 %893
        %897 = vst.msk [vmem:[#allocation2 + $0x10] sm:$0xff] %vm746, %v892
        %898 = vst.msk [vmem:[#allocation2 + $0x28] sm:$0xff] %vm746, %v894
        %901 = vrot.lane.b32.xlu0 %v677, 32
        %v902 = vpop.permute.xlu0 %901
        %903 = vrot.lane.b32.xlu0 %v682, 32
        %v904 = vpop.permute.xlu0 %903
        %907 = vst.msk [vmem:[#allocation2 + $0x10] sm:$0xff] %vm757, %v902
        %908 = vst.msk [vmem:[#allocation2 + $0x28] sm:$0xff] %vm757, %v904
        %911 = vrot.lane.b32.xlu0 %v687, 48
        %v912 = vpop.permute.xlu0 %911
        %913 = vrot.lane.b32.xlu0 %v692, 48
        %v914 = vpop.permute.xlu0 %913
        %917 = vst.msk [vmem:[#allocation2 + $0x10] sm:$0xff] %vm768, %v912
        %918 = vst.msk [vmem:[#allocation2 + $0x28] sm:$0xff] %vm768, %v914
        %921 = vrot.lane.b32.xlu0 %v697, 64
        %v922 = vpop.permute.xlu0 %921
        %923 = vrot.lane.b32.xlu0 %v702, 64
        %v924 = vpop.permute.xlu0 %923
        %927 = vst.msk [vmem:[#allocation2 + $0x10] sm:$0xff] %vm779, %v922
        %928 = vst.msk [vmem:[#allocation2 + $0x28] sm:$0xff] %vm779, %v924
        %931 = vrot.lane.b32.xlu0 %v707, 80
        %v932 = vpop.permute.xlu0 %931
        %933 = vrot.lane.b32.xlu0 %v712, 80
        %v934 = vpop.permute.xlu0 %933
        %937 = vst.msk [vmem:[#allocation2 + $0x10] sm:$0xff] %vm790, %v932
        %938 = vst.msk [vmem:[#allocation2 + $0x28] sm:$0xff] %vm790, %v934
        %941 = vrot.lane.b32.xlu0 %v717, 96
        %v942 = vpop.permute.xlu0 %941
        %943 = vrot.lane.b32.xlu0 %v722, 96
        %v944 = vpop.permute.xlu0 %943
        %947 = vst.msk [vmem:[#allocation2 + $0x10] sm:$0xff] %vm801, %v942
        %948 = vst.msk [vmem:[#allocation2 + $0x28] sm:$0xff] %vm801, %v944
        %951 = vrot.lane.b32.xlu0 %v727, 112
        %v952 = vpop.permute.xlu0 %951
        %953 = vrot.lane.b32.xlu0 %v732, 112
        %v954 = vpop.permute.xlu0 %953
        %957 = vst.msk [vmem:[#allocation2 + $0x10] sm:$0xff] %vm812, %v952
        %958 = vst.msk [vmem:[#allocation2 + $0x28] sm:$0xff] %vm812, %v954
        %v959 = vld [vmem:[%s3] sm:$0xff]
        %v960 = vld [vmem:[%s3 + $0x8] sm:$0xff]
        %v961 = vld [vmem:[#allocation2] sm:$0xff]
        %v962 = vld [vmem:[#allocation2 + $0x8] sm:$0xff]
        %v963 = vld [vmem:[#allocation2 + $0x10] sm:$0xff]
        %v964 = vld [vmem:[#allocation2 + $0x18] sm:$0xff]
        %v965 = vld [vmem:[#allocation2 + $0x20] sm:$0xff]
        %v966 = vld [vmem:[#allocation2 + $0x28] sm:$0xff]
        %969 = vrot.lane.b32.xlu0 %v497, 112
        %v970 = vpop.permute.xlu0 %969
        %971 = vrot.lane.b32.xlu0 %v502, 112
        %v972 = vpop.permute.xlu0 %971
        %s975 = scalar_lea.vmem [#allocation2], 48
        %976 = vst.msk [vmem:[%s975] sm:$0xff] %vm735, %v970
        %977 = vst.msk [vmem:[%s975 + $0x18] sm:$0xff] %vm735, %v972
        %978 = vst.msk [vmem:[%s975] sm:$0xff] %vm746, %v507
        %979 = vst.msk [vmem:[%s975 + $0x18] sm:$0xff] %vm746, %v512
        %980 = vrot.lane.b32.xlu0 %v517, 16
        %v981 = vpop.permute.xlu0 %980
        %982 = vrot.lane.b32.xlu0 %v522, 16
        %v983 = vpop.permute.xlu0 %982
        %986 = vst.msk [vmem:[%s975] sm:$0xff] %vm757, %v981
        %987 = vst.msk [vmem:[%s975 + $0x18] sm:$0xff] %vm757, %v983
        %988 = vrot.lane.b32.xlu0 %v527, 32
        %v989 = vpop.permute.xlu0 %988
        %990 = vrot.lane.b32.xlu0 %v532, 32
        %v991 = vpop.permute.xlu0 %990
        %994 = vst.msk [vmem:[%s975] sm:$0xff] %vm768, %v989
        %995 = vst.msk [vmem:[%s975 + $0x18] sm:$0xff] %vm768, %v991
        %996 = vrot.lane.b32.xlu0 %v537, 48
        %v997 = vpop.permute.xlu0 %996
        %998 = vrot.lane.b32.xlu0 %v542, 48
        %v999 = vpop.permute.xlu0 %998
        %1002 = vst.msk [vmem:[%s975] sm:$0xff] %vm779, %v997
        %1003 = vst.msk [vmem:[%s975 + $0x18] sm:$0xff] %vm779, %v999
        %1004 = vrot.lane.b32.xlu0 %v547, 64
        %v1005 = vpop.permute.xlu0 %1004
        %1006 = vrot.lane.b32.xlu0 %v552, 64
        %v1007 = vpop.permute.xlu0 %1006
        %1010 = vst.msk [vmem:[%s975] sm:$0xff] %vm790, %v1005
        %1011 = vst.msk [vmem:[%s975 + $0x18] sm:$0xff] %vm790, %v1007
        %1012 = vrot.lane.b32.xlu0 %v557, 80
        %v1013 = vpop.permute.xlu0 %1012
        %1014 = vrot.lane.b32.xlu0 %v562, 80
        %v1015 = vpop.permute.xlu0 %1014
        %1018 = vst.msk [vmem:[%s975] sm:$0xff] %vm801, %v1013
        %1019 = vst.msk [vmem:[%s975 + $0x18] sm:$0xff] %vm801, %v1015
        %1020 = vrot.lane.b32.xlu0 %v567, 96
        %v1021 = vpop.permute.xlu0 %1020
        %1022 = vrot.lane.b32.xlu0 %v572, 96
        %v1023 = vpop.permute.xlu0 %1022
        %1026 = vst.msk [vmem:[%s975] sm:$0xff] %vm812, %v1021
        %1027 = vst.msk [vmem:[%s975 + $0x18] sm:$0xff] %vm812, %v1023
        %1030 = vrot.lane.b32.xlu0 %v577, 112
        %v1031 = vpop.permute.xlu0 %1030
        %1032 = vrot.lane.b32.xlu0 %v582, 112
        %v1033 = vpop.permute.xlu0 %1032
        %1036 = vst.msk [vmem:[%s975 + $0x8] sm:$0xff] %vm735, %v1031
        %1037 = vst.msk [vmem:[%s975 + $0x20] sm:$0xff] %vm735, %v1033
        %1038 = vst.msk [vmem:[%s975 + $0x8] sm:$0xff] %vm746, %v587
        %1039 = vst.msk [vmem:[%s975 + $0x20] sm:$0xff] %vm746, %v592
        %1040 = vrot.lane.b32.xlu0 %v597, 16
        %v1041 = vpop.permute.xlu0 %1040
        %1042 = vrot.lane.b32.xlu0 %v602, 16
        %v1043 = vpop.permute.xlu0 %1042
        %1046 = vst.msk [vmem:[%s975 + $0x8] sm:$0xff] %vm757, %v1041
        %1047 = vst.msk [vmem:[%s975 + $0x20] sm:$0xff] %vm757, %v1043
        %1048 = vrot.lane.b32.xlu0 %v607, 32
        %v1049 = vpop.permute.xlu0 %1048
        %1050 = vrot.lane.b32.xlu0 %v612, 32
        %v1051 = vpop.permute.xlu0 %1050
        %1054 = vst.msk [vmem:[%s975 + $0x8] sm:$0xff] %vm768, %v1049
        %1055 = vst.msk [vmem:[%s975 + $0x20] sm:$0xff] %vm768, %v1051
        %1056 = vrot.lane.b32.xlu0 %v617, 48
        %v1057 = vpop.permute.xlu0 %1056
        %1058 = vrot.lane.b32.xlu0 %v622, 48
        %v1059 = vpop.permute.xlu0 %1058
        %1062 = vst.msk [vmem:[%s975 + $0x8] sm:$0xff] %vm779, %v1057
        %1063 = vst.msk [vmem:[%s975 + $0x20] sm:$0xff] %vm779, %v1059
        %1064 = vrot.lane.b32.xlu0 %v627, 64
        %v1065 = vpop.permute.xlu0 %1064
        %1066 = vrot.lane.b32.xlu0 %v632, 64
        %v1067 = vpop.permute.xlu0 %1066
        %1070 = vst.msk [vmem:[%s975 + $0x8] sm:$0xff] %vm790, %v1065
        %1071 = vst.msk [vmem:[%s975 + $0x20] sm:$0xff] %vm790, %v1067
        %1072 = vrot.lane.b32.xlu0 %v637, 80
        %v1073 = vpop.permute.xlu0 %1072
        %1074 = vrot.lane.b32.xlu0 %v642, 80
        %v1075 = vpop.permute.xlu0 %1074
        %1078 = vst.msk [vmem:[%s975 + $0x8] sm:$0xff] %vm801, %v1073
        %1079 = vst.msk [vmem:[%s975 + $0x20] sm:$0xff] %vm801, %v1075
        %1080 = vrot.lane.b32.xlu0 %v647, 96
        %v1081 = vpop.permute.xlu0 %1080
        %1082 = vrot.lane.b32.xlu0 %v652, 96
        %v1083 = vpop.permute.xlu0 %1082
        %1086 = vst.msk [vmem:[%s975 + $0x8] sm:$0xff] %vm812, %v1081
        %1087 = vst.msk [vmem:[%s975 + $0x20] sm:$0xff] %vm812, %v1083
        %1090 = vrot.lane.b32.xlu0 %v657, 112
        %v1091 = vpop.permute.xlu0 %1090
        %1092 = vrot.lane.b32.xlu0 %v662, 112
        %v1093 = vpop.permute.xlu0 %1092
        %1096 = vst.msk [vmem:[%s975 + $0x10] sm:$0xff] %vm735, %v1091
        %1097 = vst.msk [vmem:[%s975 + $0x28] sm:$0xff] %vm735, %v1093
        %1098 = vst.msk [vmem:[%s975 + $0x10] sm:$0xff] %vm746, %v667
        %1099 = vst.msk [vmem:[%s975 + $0x28] sm:$0xff] %vm746, %v672
        %1100 = vrot.lane.b32.xlu0 %v677, 16
        %v1101 = vpop.permute.xlu0 %1100
        %1102 = vrot.lane.b32.xlu0 %v682, 16
        %v1103 = vpop.permute.xlu0 %1102
        %1106 = vst.msk [vmem:[%s975 + $0x10] sm:$0xff] %vm757, %v1101
        %1107 = vst.msk [vmem:[%s975 + $0x28] sm:$0xff] %vm757, %v1103
        %1108 = vrot.lane.b32.xlu0 %v687, 32
        %v1109 = vpop.permute.xlu0 %1108
        %1110 = vrot.lane.b32.xlu0 %v692, 32
        %v1111 = vpop.permute.xlu0 %1110
        %1114 = vst.msk [vmem:[%s975 + $0x10] sm:$0xff] %vm768, %v1109
        %1115 = vst.msk [vmem:[%s975 + $0x28] sm:$0xff] %vm768, %v1111
        %1116 = vrot.lane.b32.xlu0 %v697, 48
        %v1117 = vpop.permute.xlu0 %1116
        %1118 = vrot.lane.b32.xlu0 %v702, 48
        %v1119 = vpop.permute.xlu0 %1118
        %1122 = vst.msk [vmem:[%s975 + $0x10] sm:$0xff] %vm779, %v1117
        %1123 = vst.msk [vmem:[%s975 + $0x28] sm:$0xff] %vm779, %v1119
        %1124 = vrot.lane.b32.xlu0 %v707, 64
        %v1125 = vpop.permute.xlu0 %1124
        %1126 = vrot.lane.b32.xlu0 %v712, 64
        %v1127 = vpop.permute.xlu0 %1126
        %1130 = vst.msk [vmem:[%s975 + $0x10] sm:$0xff] %vm790, %v1125
        %1131 = vst.msk [vmem:[%s975 + $0x28] sm:$0xff] %vm790, %v1127
        %1132 = vrot.lane.b32.xlu0 %v717, 80
        %v1133 = vpop.permute.xlu0 %1132
        %1134 = vrot.lane.b32.xlu0 %v722, 80
        %v1135 = vpop.permute.xlu0 %1134
        %1138 = vst.msk [vmem:[%s975 + $0x10] sm:$0xff] %vm801, %v1133
        %1139 = vst.msk [vmem:[%s975 + $0x28] sm:$0xff] %vm801, %v1135
        %1140 = vrot.lane.b32.xlu0 %v727, 96
        %v1141 = vpop.permute.xlu0 %1140
        %1142 = vrot.lane.b32.xlu0 %v732, 96
        %v1143 = vpop.permute.xlu0 %1142
        %1146 = vst.msk [vmem:[%s975 + $0x10] sm:$0xff] %vm812, %v1141
        %1147 = vst.msk [vmem:[%s975 + $0x28] sm:$0xff] %vm812, %v1143
        %s1148 = scalar_lea.vmem %s3, 16
        %v1149 = vld [vmem:[%s1148] sm:$0xff]
        %v1150 = vld [vmem:[%s1148 + $0x8] sm:$0xff]
        %v1151 = vld [vmem:[%s975] sm:$0xff]
        %v1152 = vld [vmem:[%s975 + $0x8] sm:$0xff]
        %v1153 = vld [vmem:[%s975 + $0x10] sm:$0xff]
        %v1154 = vld [vmem:[%s975 + $0x18] sm:$0xff]
        %v1155 = vld [vmem:[%s975 + $0x20] sm:$0xff]
        %v1156 = vld [vmem:[%s975 + $0x28] sm:$0xff]
        %v1158 = vsel %vm735, %v1149, 0
        %v1161 = vsel %vm735, %v1150, 0
        %1163 = vmatprep.subr.mxu0 %v1152
        %1164 = vmatpush1.msra.mxu0 %v1151
        %1165 = vmatprep.subr.mxu0 %v1155
        %1166 = vmatpush1.msra.mxu0 %v1154
        %1167 = vmatprep.subr.mxu0 0.0
        %1168 = vmatpush1.msra.mxu0 0.0
        %1169 = vmatprep.subr.mxu0 0.0
        %1170 = vmatpush1.msra.mxu0 0.0
        %1171 = vmatprep.subr.mxu0 0.0
        %1172 = vmatpush1.msra.mxu0 0.0
        %1173 = vmatprep.subr.mxu0 0.0
        %1174 = vmatpush1.msra.mxu0 0.0
        %1175 = vmatprep.subr.mxu0 0.0
        %1176 = vmatpush1.msra.mxu0 0.0
        %1177 = vmatprep.subr.mxu0 0.0
        %1178 = vmatpush1.msra.mxu0 0.0
        %1179 = vmatprep.subr.mxu0 0.0
        %1180 = vmatpush1.msra.mxu0 0.0
        %1181 = vmatprep.subr.mxu0 0.0
        %1182 = vmatpush1.msra.mxu0 0.0
        %1183 = vmatprep.subr.mxu0 0.0
        %1184 = vmatpush1.msra.mxu0 0.0
        %1185 = vmatprep.subr.mxu0 0.0
        %1186 = vmatpush1.msra.mxu0 0.0
        %1187 = vmatprep.subr.mxu0 0.0
        %1188 = vmatpush1.msra.mxu0 0.0
        %1189 = vmatprep.subr.mxu0 0.0
        %1190 = vmatpush1.msra.mxu0 0.0
        %1191 = vmatprep.subr.mxu0 0.0
        %1192 = vmatpush1.msra.mxu0 0.0
        %1193 = vmatprep.subr.mxu0 0.0
        %1194 = vmatpush1.msra.mxu0 0.0
        %1195 = vmatprep.subr.mxu0 0.0
        %1196 = vmatpush1.msra.mxu0 0.0
        %1197 = vmatprep.subr.mxu0 0.0
        %1198 = vmatpush1.msra.mxu0 0.0
        %1199 = vmatprep.subr.mxu0 0.0
        %1200 = vmatpush1.msra.mxu0 0.0
        %1201 = vmatprep.subr.mxu0 0.0
        %1202 = vmatpush1.msra.mxu0 0.0
        %1203 = vmatprep.subr.mxu0 0.0
        %1204 = vmatpush1.msra.mxu0 0.0
        %1205 = vmatprep.subr.mxu0 0.0
        %1206 = vmatpush1.msra.mxu0 0.0
        %1207 = vmatprep.subr.mxu0 0.0
        %1208 = vmatpush1.msra.mxu0 0.0
        %1209 = vmatprep.subr.mxu0 0.0
        %1210 = vmatpush1.msra.mxu0 0.0
        %1211 = vmatprep.subr.mxu0 0.0
        %1212 = vmatpush1.msra.mxu0 0.0
        %1213 = vmatprep.subr.mxu0 0.0
        %1214 = vmatpush1.msra.mxu0 0.0
        %1215 = vmatprep.subr.mxu0 0.0
        %1216 = vmatpush1.msra.mxu0 0.0
        %1217 = vmatprep.subr.mxu0 0.0
        %1218 = vmatpush1.msra.mxu0 0.0
        %1219 = vmatprep.subr.mxu0 0.0
        %1220 = vmatpush1.msra.mxu0 0.0
        %1221 = vmatprep.subr.mxu0 0.0
        %1222 = vmatpush1.msra.mxu0 0.0
        %1223 = vmatprep.subr.mxu0 0.0
        %1224 = vmatpush1.msra.mxu0 0.0
        %1225 = vmatprep.subr.mxu0 0.0
        %1226 = vmatpush1.msra.mxu0 0.0
        %1227 = vmatprep.mubr.f32.mxu0 0.0
        %1228 = vmatmul.mubr.f32.gmra.mrb[0].mxu0 %v1158
        %v1229 = vpop.f32.mrb[0].mxu0
        %v1230 = vadd.f32 0.0, %v1229
        %v1231 = vpop.f32.mrb[0].mxu0
        %v1232 = vadd.f32 0.0, %v1231
        %1233 = vmatprep.mubr.f32.mxu0 0.0
        %1234 = vmatmul.mubr.f32.gmra.mrb[0].mxu0 %v1161
        %v1235 = vpop.f32.mrb[0].mxu0
        %v1236 = vadd.f32 0.0, %v1235
        %v1237 = vpop.f32.mrb[0].mxu0
        %v1238 = vadd.f32 0.0, %v1237
        %1239 = vdwg.mxu0
        %1240 = vmatprep.subr.mxu0 0.0
        %1241 = vmatpush1.msra.mxu0 %v1153
        %1242 = vmatprep.subr.mxu0 0.0
        %1243 = vmatpush1.msra.mxu0 %v1156
        %1244 = vmatprep.subr.mxu0 0.0
        %1245 = vmatpush1.msra.mxu0 0.0
        %1246 = vmatprep.subr.mxu0 0.0
        %1247 = vmatpush1.msra.mxu0 0.0
        %1248 = vmatprep.subr.mxu0 0.0
        %1249 = vmatpush1.msra.mxu0 0.0
        %1250 = vmatprep.subr.mxu0 0.0
        %1251 = vmatpush1.msra.mxu0 0.0
        %1252 = vmatprep.subr.mxu0 0.0
        %1253 = vmatpush1.msra.mxu0 0.0
        %1254 = vmatprep.subr.mxu0 0.0
        %1255 = vmatpush1.msra.mxu0 0.0
        %1256 = vmatprep.subr.mxu0 0.0
        %1257 = vmatpush1.msra.mxu0 0.0
        %1258 = vmatprep.subr.mxu0 0.0
        %1259 = vmatpush1.msra.mxu0 0.0
        %1260 = vmatprep.subr.mxu0 0.0
        %1261 = vmatpush1.msra.mxu0 0.0
        %1262 = vmatprep.subr.mxu0 0.0
        %1263 = vmatpush1.msra.mxu0 0.0
        %1264 = vmatprep.subr.mxu0 0.0
        %1265 = vmatpush1.msra.mxu0 0.0
        %1266 = vmatprep.subr.mxu0 0.0
        %1267 = vmatpush1.msra.mxu0 0.0
        %1268 = vmatprep.subr.mxu0 0.0
        %1269 = vmatpush1.msra.mxu0 0.0
        %1270 = vmatprep.subr.mxu0 0.0
        %1271 = vmatpush1.msra.mxu0 0.0
        %1272 = vmatprep.subr.mxu0 0.0
        %1273 = vmatpush1.msra.mxu0 0.0
        %1274 = vmatprep.subr.mxu0 0.0
        %1275 = vmatpush1.msra.mxu0 0.0
        %1276 = vmatprep.subr.mxu0 0.0
        %1277 = vmatpush1.msra.mxu0 0.0
        %1278 = vmatprep.subr.mxu0 0.0
        %1279 = vmatpush1.msra.mxu0 0.0
        %1280 = vmatprep.subr.mxu0 0.0
        %1281 = vmatpush1.msra.mxu0 0.0
        %1282 = vmatprep.subr.mxu0 0.0
        %1283 = vmatpush1.msra.mxu0 0.0
        %1284 = vmatprep.subr.mxu0 0.0
        %1285 = vmatpush1.msra.mxu0 0.0
        %1286 = vmatprep.subr.mxu0 0.0
        %1287 = vmatpush1.msra.mxu0 0.0
        %1288 = vmatprep.subr.mxu0 0.0
        %1289 = vmatpush1.msra.mxu0 0.0
        %1290 = vmatprep.subr.mxu0 0.0
        %1291 = vmatpush1.msra.mxu0 0.0
        %1292 = vmatprep.subr.mxu0 0.0
        %1293 = vmatpush1.msra.mxu0 0.0
        %1294 = vmatprep.subr.mxu0 0.0
        %1295 = vmatpush1.msra.mxu0 0.0
        %1296 = vmatprep.subr.mxu0 0.0
        %1297 = vmatpush1.msra.mxu0 0.0
        %1298 = vmatprep.subr.mxu0 0.0
        %1299 = vmatpush1.msra.mxu0 0.0
        %1300 = vmatprep.subr.mxu0 0.0
        %1301 = vmatpush1.msra.mxu0 0.0
        %1302 = vmatprep.subr.mxu0 0.0
        %1303 = vmatpush1.msra.mxu0 0.0
        %1304 = vmatprep.mubr.f32.mxu0 0.0
        %1305 = vmatmul.mubr.f32.gmra.mrb[0].mxu0 %v1158
        %v1306 = vpop.f32.mrb[0].mxu0
        %v1307 = vadd.f32 0.0, %v1306
        %v1308 = vpop.f32.mrb[0].mxu0
        %1309 = vmatprep.mubr.f32.mxu0 0.0
        %1310 = vmatmul.mubr.f32.gmra.mrb[0].mxu0 %v1161
        %v1311 = vpop.f32.mrb[0].mxu0
        %v1312 = vadd.f32 0.0, %v1311
        %v1313 = vpop.f32.mrb[0].mxu0
        %1314 = vdwg.mxu0
        %v1316 = vsel %vm735, %v959, 0
        %v1319 = vsel %vm735, %v960, 0
        %1321 = vmatprep.subr.mxu0 %v962
        %1322 = vmatpush1.msra.mxu0 %v961
        %1323 = vmatprep.subr.mxu0 %v965
        %1324 = vmatpush1.msra.mxu0 %v964
        %1325 = vmatprep.subr.mxu0 0.0
        %1326 = vmatpush1.msra.mxu0 0.0
        %1327 = vmatprep.subr.mxu0 0.0
        %1328 = vmatpush1.msra.mxu0 0.0
        %1329 = vmatprep.subr.mxu0 0.0
        %1330 = vmatpush1.msra.mxu0 0.0
        %1331 = vmatprep.subr.mxu0 0.0
        %1332 = vmatpush1.msra.mxu0 0.0
        %1333 = vmatprep.subr.mxu0 0.0
        %1334 = vmatpush1.msra.mxu0 0.0
        %1335 = vmatprep.subr.mxu0 0.0
        %1336 = vmatpush1.msra.mxu0 0.0
        %1337 = vmatprep.subr.mxu0 0.0
        %1338 = vmatpush1.msra.mxu0 0.0
        %1339 = vmatprep.subr.mxu0 0.0
        %1340 = vmatpush1.msra.mxu0 0.0
        %1341 = vmatprep.subr.mxu0 0.0
        %1342 = vmatpush1.msra.mxu0 0.0
        %1343 = vmatprep.subr.mxu0 0.0
        %1344 = vmatpush1.msra.mxu0 0.0
        %1345 = vmatprep.subr.mxu0 0.0
        %1346 = vmatpush1.msra.mxu0 0.0
        %1347 = vmatprep.subr.mxu0 0.0
        %1348 = vmatpush1.msra.mxu0 0.0
        %1349 = vmatprep.subr.mxu0 0.0
        %1350 = vmatpush1.msra.mxu0 0.0
        %1351 = vmatprep.subr.mxu0 0.0
        %1352 = vmatpush1.msra.mxu0 0.0
        %1353 = vmatprep.subr.mxu0 0.0
        %1354 = vmatpush1.msra.mxu0 0.0
        %1355 = vmatprep.subr.mxu0 0.0
        %1356 = vmatpush1.msra.mxu0 0.0
        %1357 = vmatprep.subr.mxu0 0.0
        %1358 = vmatpush1.msra.mxu0 0.0
        %1359 = vmatprep.subr.mxu0 0.0
        %1360 = vmatpush1.msra.mxu0 0.0
        %1361 = vmatprep.subr.mxu0 0.0
        %1362 = vmatpush1.msra.mxu0 0.0
        %1363 = vmatprep.subr.mxu0 0.0
        %1364 = vmatpush1.msra.mxu0 0.0
        %1365 = vmatprep.subr.mxu0 0.0
        %1366 = vmatpush1.msra.mxu0 0.0
        %1367 = vmatprep.subr.mxu0 0.0
        %1368 = vmatpush1.msra.mxu0 0.0
        %1369 = vmatprep.subr.mxu0 0.0
        %1370 = vmatpush1.msra.mxu0 0.0
        %1371 = vmatprep.subr.mxu0 0.0
        %1372 = vmatpush1.msra.mxu0 0.0
        %1373 = vmatprep.subr.mxu0 0.0
        %1374 = vmatpush1.msra.mxu0 0.0
        %1375 = vmatprep.subr.mxu0 0.0
        %1376 = vmatpush1.msra.mxu0 0.0
        %1377 = vmatprep.subr.mxu0 0.0
        %1378 = vmatpush1.msra.mxu0 0.0
        %1379 = vmatprep.subr.mxu0 0.0
        %1380 = vmatpush1.msra.mxu0 0.0
        %1381 = vmatprep.subr.mxu0 0.0
        %1382 = vmatpush1.msra.mxu0 0.0
        %1383 = vmatprep.subr.mxu0 0.0
        %1384 = vmatpush1.msra.mxu0 0.0
        %1385 = vmatprep.mubr.f32.mxu0 0.0
        %1386 = vmatmul.mubr.f32.gmra.mrb[0].mxu0 %v1316
        %v1387 = vpop.f32.mrb[0].mxu0
        %v1388 = vadd.f32 %v1230, %v1387
        %v1389 = vpop.f32.mrb[0].mxu0
        %v1390 = vadd.f32 %v1232, %v1389
        %1391 = vmatprep.mubr.f32.mxu0 0.0
        %1392 = vmatmul.mubr.f32.gmra.mrb[0].mxu0 %v1319
        %v1393 = vpop.f32.mrb[0].mxu0
        %v1394 = vadd.f32 %v1236, %v1393
        %v1395 = vpop.f32.mrb[0].mxu0
        %v1396 = vadd.f32 %v1238, %v1395
        %1397 = vdwg.mxu0
        %1398 = vmatprep.subr.mxu0 0.0
        %1399 = vmatpush1.msra.mxu0 %v963
        %1400 = vmatprep.subr.mxu0 0.0
        %1401 = vmatpush1.msra.mxu0 %v966
        %1402 = vmatprep.subr.mxu0 0.0
        %1403 = vmatpush1.msra.mxu0 0.0
        %1404 = vmatprep.subr.mxu0 0.0
        %1405 = vmatpush1.msra.mxu0 0.0
        %1406 = vmatprep.subr.mxu0 0.0
        %1407 = vmatpush1.msra.mxu0 0.0
        %1408 = vmatprep.subr.mxu0 0.0
        %1409 = vmatpush1.msra.mxu0 0.0
        %1410 = vmatprep.subr.mxu0 0.0
        %1411 = vmatpush1.msra.mxu0 0.0
        %1412 = vmatprep.subr.mxu0 0.0
        %1413 = vmatpush1.msra.mxu0 0.0
        %1414 = vmatprep.subr.mxu0 0.0
        %1415 = vmatpush1.msra.mxu0 0.0
        %1416 = vmatprep.subr.mxu0 0.0
        %1417 = vmatpush1.msra.mxu0 0.0
        %1418 = vmatprep.subr.mxu0 0.0
        %1419 = vmatpush1.msra.mxu0 0.0
        %1420 = vmatprep.subr.mxu0 0.0
        %1421 = vmatpush1.msra.mxu0 0.0
        %1422 = vmatprep.subr.mxu0 0.0
        %1423 = vmatpush1.msra.mxu0 0.0
        %1424 = vmatprep.subr.mxu0 0.0
        %1425 = vmatpush1.msra.mxu0 0.0
        %1426 = vmatprep.subr.mxu0 0.0
        %1427 = vmatpush1.msra.mxu0 0.0
        %1428 = vmatprep.subr.mxu0 0.0
        %1429 = vmatpush1.msra.mxu0 0.0
        %1430 = vmatprep.subr.mxu0 0.0
        %1431 = vmatpush1.msra.mxu0 0.0
        %1432 = vmatprep.subr.mxu0 0.0
        %1433 = vmatpush1.msra.mxu0 0.0
        %1434 = vmatprep.subr.mxu0 0.0
        %1435 = vmatpush1.msra.mxu0 0.0
        %1436 = vmatprep.subr.mxu0 0.0
        %1437 = vmatpush1.msra.mxu0 0.0
        %1438 = vmatprep.subr.mxu0 0.0
        %1439 = vmatpush1.msra.mxu0 0.0
        %1440 = vmatprep.subr.mxu0 0.0
        %1441 = vmatpush1.msra.mxu0 0.0
        %1442 = vmatprep.subr.mxu0 0.0
        %1443 = vmatpush1.msra.mxu0 0.0
        %1444 = vmatprep.subr.mxu0 0.0
        %1445 = vmatpush1.msra.mxu0 0.0
        %1446 = vmatprep.subr.mxu0 0.0
        %1447 = vmatpush1.msra.mxu0 0.0
        %1448 = vmatprep.subr.mxu0 0.0
        %1449 = vmatpush1.msra.mxu0 0.0
        %1450 = vmatprep.subr.mxu0 0.0
        %1451 = vmatpush1.msra.mxu0 0.0
        %1452 = vmatprep.subr.mxu0 0.0
        %1453 = vmatpush1.msra.mxu0 0.0
        %1454 = vmatprep.subr.mxu0 0.0
        %1455 = vmatpush1.msra.mxu0 0.0
        %1456 = vmatprep.subr.mxu0 0.0
        %1457 = vmatpush1.msra.mxu0 0.0
        %1458 = vmatprep.subr.mxu0 0.0
        %1459 = vmatpush1.msra.mxu0 0.0
        %1460 = vmatprep.subr.mxu0 0.0
        %1461 = vmatpush1.msra.mxu0 0.0
        %1462 = vmatprep.mubr.f32.mxu0 0.0
        %1463 = vmatmul.mubr.f32.gmra.mrb[0].mxu0 %v1316
        %v1464 = vpop.f32.mrb[0].mxu0
        %v1465 = vadd.f32 %v1307, %v1464
        %v1466 = vpop.f32.mrb[0].mxu0
        %1467 = vmatprep.mubr.f32.mxu0 0.0
        %1468 = vmatmul.mubr.f32.gmra.mrb[0].mxu0 %v1319
        %v1469 = vpop.f32.mrb[0].mxu0
        %v1470 = vadd.f32 %v1312, %v1469
        %v1471 = vpop.f32.mrb[0].mxu0
        %1472 = vdwg.mxu0
        %1473 = vrot.lane.b32.xlu0 %v497, 96
        %v1474 = vpop.permute.xlu0 %1473
        %1475 = vrot.lane.b32.xlu0 %v502, 96
        %v1476 = vpop.permute.xlu0 %1475
        %s1479 = scalar_lea.vmem [#allocation2], 96
        %1480 = vst.msk [vmem:[%s1479] sm:$0xff] %vm735, %v1474
        %1481 = vst.msk [vmem:[%s1479 + $0x18] sm:$0xff] %vm735, %v1476
        %1482 = vrot.lane.b32.xlu0 %v507, 112
        %v1483 = vpop.permute.xlu0 %1482
        %1484 = vrot.lane.b32.xlu0 %v512, 112
        %v1485 = vpop.permute.xlu0 %1484
        %1488 = vst.msk [vmem:[%s1479] sm:$0xff] %vm746, %v1483
        %1489 = vst.msk [vmem:[%s1479 + $0x18] sm:$0xff] %vm746, %v1485
        %1490 = vst.msk [vmem:[%s1479] sm:$0xff] %vm757, %v517
        %1491 = vst.msk [vmem:[%s1479 + $0x18] sm:$0xff] %vm757, %v522
        %1492 = vrot.lane.b32.xlu0 %v527, 16
        %v1493 = vpop.permute.xlu0 %1492
        %1494 = vrot.lane.b32.xlu0 %v532, 16
        %v1495 = vpop.permute.xlu0 %1494
        %1498 = vst.msk [vmem:[%s1479] sm:$0xff] %vm768, %v1493
        %1499 = vst.msk [vmem:[%s1479 + $0x18] sm:$0xff] %vm768, %v1495
        %1500 = vrot.lane.b32.xlu0 %v537, 32
        %v1501 = vpop.permute.xlu0 %1500
        %1502 = vrot.lane.b32.xlu0 %v542, 32
        %v1503 = vpop.permute.xlu0 %1502
        %1506 = vst.msk [vmem:[%s1479] sm:$0xff] %vm779, %v1501
        %1507 = vst.msk [vmem:[%s1479 + $0x18] sm:$0xff] %vm779, %v1503
        %1508 = vrot.lane.b32.xlu0 %v547, 48
        %v1509 = vpop.permute.xlu0 %1508
        %1510 = vrot.lane.b32.xlu0 %v552, 48
        %v1511 = vpop.permute.xlu0 %1510
        %1514 = vst.msk [vmem:[%s1479] sm:$0xff] %vm790, %v1509
        %1515 = vst.msk [vmem:[%s1479 + $0x18] sm:$0xff] %vm790, %v1511
        %1516 = vrot.lane.b32.xlu0 %v557, 64
        %v1517 = vpop.permute.xlu0 %1516
        %1518 = vrot.lane.b32.xlu0 %v562, 64
        %v1519 = vpop.permute.xlu0 %1518
        %1522 = vst.msk [vmem:[%s1479] sm:$0xff] %vm801, %v1517
        %1523 = vst.msk [vmem:[%s1479 + $0x18] sm:$0xff] %vm801, %v1519
        %1524 = vrot.lane.b32.xlu0 %v567, 80
        %v1525 = vpop.permute.xlu0 %1524
        %1526 = vrot.lane.b32.xlu0 %v572, 80
        %v1527 = vpop.permute.xlu0 %1526
        %1530 = vst.msk [vmem:[%s1479] sm:$0xff] %vm812, %v1525
        %1531 = vst.msk [vmem:[%s1479 + $0x18] sm:$0xff] %vm812, %v1527
        %1532 = vrot.lane.b32.xlu0 %v577, 96
        %v1533 = vpop.permute.xlu0 %1532
        %1534 = vrot.lane.b32.xlu0 %v582, 96
        %v1535 = vpop.permute.xlu0 %1534
        %1538 = vst.msk [vmem:[%s1479 + $0x8] sm:$0xff] %vm735, %v1533
        %1539 = vst.msk [vmem:[%s1479 + $0x20] sm:$0xff] %vm735, %v1535
        %1540 = vrot.lane.b32.xlu0 %v587, 112
        %v1541 = vpop.permute.xlu0 %1540
        %1542 = vrot.lane.b32.xlu0 %v592, 112
        %v1543 = vpop.permute.xlu0 %1542
        %1546 = vst.msk [vmem:[%s1479 + $0x8] sm:$0xff] %vm746, %v1541
        %1547 = vst.msk [vmem:[%s1479 + $0x20] sm:$0xff] %vm746, %v1543
        %1548 = vst.msk [vmem:[%s1479 + $0x8] sm:$0xff] %vm757, %v597
        %1549 = vst.msk [vmem:[%s1479 + $0x20] sm:$0xff] %vm757, %v602
        %1550 = vrot.lane.b32.xlu0 %v607, 16
        %v1551 = vpop.permute.xlu0 %1550
        %1552 = vrot.lane.b32.xlu0 %v612, 16
        %v1553 = vpop.permute.xlu0 %1552
        %1556 = vst.msk [vmem:[%s1479 + $0x8] sm:$0xff] %vm768, %v1551
        %1557 = vst.msk [vmem:[%s1479 + $0x20] sm:$0xff] %vm768, %v1553
        %1558 = vrot.lane.b32.xlu0 %v617, 32
        %v1559 = vpop.permute.xlu0 %1558
        %1560 = vrot.lane.b32.xlu0 %v622, 32
        %v1561 = vpop.permute.xlu0 %1560
        %1564 = vst.msk [vmem:[%s1479 + $0x8] sm:$0xff] %vm779, %v1559
        %1565 = vst.msk [vmem:[%s1479 + $0x20] sm:$0xff] %vm779, %v1561
        %1566 = vrot.lane.b32.xlu0 %v627, 48
        %v1567 = vpop.permute.xlu0 %1566
        %1568 = vrot.lane.b32.xlu0 %v632, 48
        %v1569 = vpop.permute.xlu0 %1568
        %1572 = vst.msk [vmem:[%s1479 + $0x8] sm:$0xff] %vm790, %v1567
        %1573 = vst.msk [vmem:[%s1479 + $0x20] sm:$0xff] %vm790, %v1569
        %1574 = vrot.lane.b32.xlu0 %v637, 64
        %v1575 = vpop.permute.xlu0 %1574
        %1576 = vrot.lane.b32.xlu0 %v642, 64
        %v1577 = vpop.permute.xlu0 %1576
        %1580 = vst.msk [vmem:[%s1479 + $0x8] sm:$0xff] %vm801, %v1575
        %1581 = vst.msk [vmem:[%s1479 + $0x20] sm:$0xff] %vm801, %v1577
        %1582 = vrot.lane.b32.xlu0 %v647, 80
        %v1583 = vpop.permute.xlu0 %1582
        %1584 = vrot.lane.b32.xlu0 %v652, 80
        %v1585 = vpop.permute.xlu0 %1584
        %1588 = vst.msk [vmem:[%s1479 + $0x8] sm:$0xff] %vm812, %v1583
        %1589 = vst.msk [vmem:[%s1479 + $0x20] sm:$0xff] %vm812, %v1585
        %1590 = vrot.lane.b32.xlu0 %v657, 96
        %v1591 = vpop.permute.xlu0 %1590
        %1592 = vrot.lane.b32.xlu0 %v662, 96
        %v1593 = vpop.permute.xlu0 %1592
        %1596 = vst.msk [vmem:[%s1479 + $0x10] sm:$0xff] %vm735, %v1591
        %1597 = vst.msk [vmem:[%s1479 + $0x28] sm:$0xff] %vm735, %v1593
        %1598 = vrot.lane.b32.xlu0 %v667, 112
        %v1599 = vpop.permute.xlu0 %1598
        %1600 = vrot.lane.b32.xlu0 %v672, 112
        %v1601 = vpop.permute.xlu0 %1600
        %1604 = vst.msk [vmem:[%s1479 + $0x10] sm:$0xff] %vm746, %v1599
        %1605 = vst.msk [vmem:[%s1479 + $0x28] sm:$0xff] %vm746, %v1601
        %1606 = vst.msk [vmem:[%s1479 + $0x10] sm:$0xff] %vm757, %v677
        %1607 = vst.msk [vmem:[%s1479 + $0x28] sm:$0xff] %vm757, %v682
        %1608 = vrot.lane.b32.xlu0 %v687, 16
        %v1609 = vpop.permute.xlu0 %1608
        %1610 = vrot.lane.b32.xlu0 %v692, 16
        %v1611 = vpop.permute.xlu0 %1610
        %1614 = vst.msk [vmem:[%s1479 + $0x10] sm:$0xff] %vm768, %v1609
        %1615 = vst.msk [vmem:[%s1479 + $0x28] sm:$0xff] %vm768, %v1611
        %1616 = vrot.lane.b32.xlu0 %v697, 32
        %v1617 = vpop.permute.xlu0 %1616
        %1618 = vrot.lane.b32.xlu0 %v702, 32
        %v1619 = vpop.permute.xlu0 %1618
        %1622 = vst.msk [vmem:[%s1479 + $0x10] sm:$0xff] %vm779, %v1617
        %1623 = vst.msk [vmem:[%s1479 + $0x28] sm:$0xff] %vm779, %v1619
        %1624 = vrot.lane.b32.xlu0 %v707, 48
        %v1625 = vpop.permute.xlu0 %1624
        %1626 = vrot.lane.b32.xlu0 %v712, 48
        %v1627 = vpop.permute.xlu0 %1626
        %1630 = vst.msk [vmem:[%s1479 + $0x10] sm:$0xff] %vm790, %v1625
        %1631 = vst.msk [vmem:[%s1479 + $0x28] sm:$0xff] %vm790, %v1627
        %1632 = vrot.lane.b32.xlu0 %v717, 64
        %v1633 = vpop.permute.xlu0 %1632
        %1634 = vrot.lane.b32.xlu0 %v722, 64
        %v1635 = vpop.permute.xlu0 %1634
        %1638 = vst.msk [vmem:[%s1479 + $0x10] sm:$0xff] %vm801, %v1633
        %1639 = vst.msk [vmem:[%s1479 + $0x28] sm:$0xff] %vm801, %v1635
        %1640 = vrot.lane.b32.xlu0 %v727, 80
        %v1641 = vpop.permute.xlu0 %1640
        %1642 = vrot.lane.b32.xlu0 %v732, 80
        %v1643 = vpop.permute.xlu0 %1642
        %1646 = vst.msk [vmem:[%s1479 + $0x10] sm:$0xff] %vm812, %v1641
        %1647 = vst.msk [vmem:[%s1479 + $0x28] sm:$0xff] %vm812, %v1643
        %s1648 = scalar_lea.vmem %s3, 32
        %v1649 = vld [vmem:[%s1648] sm:$0xff]
        %v1650 = vld [vmem:[%s1648 + $0x8] sm:$0xff]
        %v1651 = vld [vmem:[%s1479] sm:$0xff]
        %v1652 = vld [vmem:[%s1479 + $0x8] sm:$0xff]
        %v1653 = vld [vmem:[%s1479 + $0x10] sm:$0xff]
        %v1654 = vld [vmem:[%s1479 + $0x18] sm:$0xff]
        %v1655 = vld [vmem:[%s1479 + $0x20] sm:$0xff]
        %v1656 = vld [vmem:[%s1479 + $0x28] sm:$0xff]
        %v1658 = vsel %vm735, %v1649, 0
        %v1661 = vsel %vm735, %v1650, 0
        %1663 = vmatprep.subr.mxu0 %v1652
        %1664 = vmatpush1.msra.mxu0 %v1651
        %1665 = vmatprep.subr.mxu0 %v1655
        %1666 = vmatpush1.msra.mxu0 %v1654
        %1667 = vmatprep.subr.mxu0 0.0
        %1668 = vmatpush1.msra.mxu0 0.0
        %1669 = vmatprep.subr.mxu0 0.0
        %1670 = vmatpush1.msra.mxu0 0.0
        %1671 = vmatprep.subr.mxu0 0.0
        %1672 = vmatpush1.msra.mxu0 0.0
        %1673 = vmatprep.subr.mxu0 0.0
        %1674 = vmatpush1.msra.mxu0 0.0
        %1675 = vmatprep.subr.mxu0 0.0
        %1676 = vmatpush1.msra.mxu0 0.0
        %1677 = vmatprep.subr.mxu0 0.0
        %1678 = vmatpush1.msra.mxu0 0.0
        %1679 = vmatprep.subr.mxu0 0.0
        %1680 = vmatpush1.msra.mxu0 0.0
        %1681 = vmatprep.subr.mxu0 0.0
        %1682 = vmatpush1.msra.mxu0 0.0
        %1683 = vmatprep.subr.mxu0 0.0
        %1684 = vmatpush1.msra.mxu0 0.0
        %1685 = vmatprep.subr.mxu0 0.0
        %1686 = vmatpush1.msra.mxu0 0.0
        %1687 = vmatprep.subr.mxu0 0.0
        %1688 = vmatpush1.msra.mxu0 0.0
        %1689 = vmatprep.subr.mxu0 0.0
        %1690 = vmatpush1.msra.mxu0 0.0
        %1691 = vmatprep.subr.mxu0 0.0
        %1692 = vmatpush1.msra.mxu0 0.0
        %1693 = vmatprep.subr.mxu0 0.0
        %1694 = vmatpush1.msra.mxu0 0.0
        %1695 = vmatprep.subr.mxu0 0.0
        %1696 = vmatpush1.msra.mxu0 0.0
        %1697 = vmatprep.subr.mxu0 0.0
        %1698 = vmatpush1.msra.mxu0 0.0
        %1699 = vmatprep.subr.mxu0 0.0
        %1700 = vmatpush1.msra.mxu0 0.0
        %1701 = vmatprep.subr.mxu0 0.0
        %1702 = vmatpush1.msra.mxu0 0.0
        %1703 = vmatprep.subr.mxu0 0.0
        %1704 = vmatpush1.msra.mxu0 0.0
        %1705 = vmatprep.subr.mxu0 0.0
        %1706 = vmatpush1.msra.mxu0 0.0
        %1707 = vmatprep.subr.mxu0 0.0
        %1708 = vmatpush1.msra.mxu0 0.0
        %1709 = vmatprep.subr.mxu0 0.0
        %1710 = vmatpush1.msra.mxu0 0.0
        %1711 = vmatprep.subr.mxu0 0.0
        %1712 = vmatpush1.msra.mxu0 0.0
        %1713 = vmatprep.subr.mxu0 0.0
        %1714 = vmatpush1.msra.mxu0 0.0
        %1715 = vmatprep.subr.mxu0 0.0
        %1716 = vmatpush1.msra.mxu0 0.0
        %1717 = vmatprep.subr.mxu0 0.0
        %1718 = vmatpush1.msra.mxu0 0.0
        %1719 = vmatprep.subr.mxu0 0.0
        %1720 = vmatpush1.msra.mxu0 0.0
        %1721 = vmatprep.subr.mxu0 0.0
        %1722 = vmatpush1.msra.mxu0 0.0
        %1723 = vmatprep.subr.mxu0 0.0
        %1724 = vmatpush1.msra.mxu0 0.0
        %1725 = vmatprep.subr.mxu0 0.0
        %1726 = vmatpush1.msra.mxu0 0.0
        %1727 = vmatprep.mubr.f32.mxu0 0.0
        %1728 = vmatmul.mubr.f32.gmra.mrb[0].mxu0 %v1658
        %v1729 = vpop.f32.mrb[0].mxu0
        %v1730 = vadd.f32 0.0, %v1729
        %v1731 = vpop.f32.mrb[0].mxu0
        %v1732 = vadd.f32 0.0, %v1731
        %1733 = vmatprep.mubr.f32.mxu0 0.0
        %1734 = vmatmul.mubr.f32.gmra.mrb[0].mxu0 %v1661
        %v1735 = vpop.f32.mrb[0].mxu0
        %v1736 = vadd.f32 0.0, %v1735
        %v1737 = vpop.f32.mrb[0].mxu0
        %v1738 = vadd.f32 0.0, %v1737
        %1739 = vdwg.mxu0
        %1740 = vmatprep.subr.mxu0 0.0
        %1741 = vmatpush1.msra.mxu0 %v1653
        %1742 = vmatprep.subr.mxu0 0.0
        %1743 = vmatpush1.msra.mxu0 %v1656
        %1744 = vmatprep.subr.mxu0 0.0
        %1745 = vmatpush1.msra.mxu0 0.0
        %1746 = vmatprep.subr.mxu0 0.0
        %1747 = vmatpush1.msra.mxu0 0.0
        %1748 = vmatprep.subr.mxu0 0.0
        %1749 = vmatpush1.msra.mxu0 0.0
        %1750 = vmatprep.subr.mxu0 0.0
        %1751 = vmatpush1.msra.mxu0 0.0
        %1752 = vmatprep.subr.mxu0 0.0
        %1753 = vmatpush1.msra.mxu0 0.0
        %1754 = vmatprep.subr.mxu0 0.0
        %1755 = vmatpush1.msra.mxu0 0.0
        %1756 = vmatprep.subr.mxu0 0.0
        %1757 = vmatpush1.msra.mxu0 0.0
        %1758 = vmatprep.subr.mxu0 0.0
        %1759 = vmatpush1.msra.mxu0 0.0
        %1760 = vmatprep.subr.mxu0 0.0
        %1761 = vmatpush1.msra.mxu0 0.0
        %1762 = vmatprep.subr.mxu0 0.0
        %1763 = vmatpush1.msra.mxu0 0.0
        %1764 = vmatprep.subr.mxu0 0.0
        %1765 = vmatpush1.msra.mxu0 0.0
        %1766 = vmatprep.subr.mxu0 0.0
        %1767 = vmatpush1.msra.mxu0 0.0
        %1768 = vmatprep.subr.mxu0 0.0
        %1769 = vmatpush1.msra.mxu0 0.0
        %1770 = vmatprep.subr.mxu0 0.0
        %1771 = vmatpush1.msra.mxu0 0.0
        %1772 = vmatprep.subr.mxu0 0.0
        %1773 = vmatpush1.msra.mxu0 0.0
        %1774 = vmatprep.subr.mxu0 0.0
        %1775 = vmatpush1.msra.mxu0 0.0
        %1776 = vmatprep.subr.mxu0 0.0
        %1777 = vmatpush1.msra.mxu0 0.0
        %1778 = vmatprep.subr.mxu0 0.0
        %1779 = vmatpush1.msra.mxu0 0.0
        %1780 = vmatprep.subr.mxu0 0.0
        %1781 = vmatpush1.msra.mxu0 0.0
        %1782 = vmatprep.subr.mxu0 0.0
        %1783 = vmatpush1.msra.mxu0 0.0
        %1784 = vmatprep.subr.mxu0 0.0
        %1785 = vmatpush1.msra.mxu0 0.0
        %1786 = vmatprep.subr.mxu0 0.0
        %1787 = vmatpush1.msra.mxu0 0.0
        %1788 = vmatprep.subr.mxu0 0.0
        %1789 = vmatpush1.msra.mxu0 0.0
        %1790 = vmatprep.subr.mxu0 0.0
        %1791 = vmatpush1.msra.mxu0 0.0
        %1792 = vmatprep.subr.mxu0 0.0
        %1793 = vmatpush1.msra.mxu0 0.0
        %1794 = vmatprep.subr.mxu0 0.0
        %1795 = vmatpush1.msra.mxu0 0.0
        %1796 = vmatprep.subr.mxu0 0.0
        %1797 = vmatpush1.msra.mxu0 0.0
        %1798 = vmatprep.subr.mxu0 0.0
        %1799 = vmatpush1.msra.mxu0 0.0
        %1800 = vmatprep.subr.mxu0 0.0
        %1801 = vmatpush1.msra.mxu0 0.0
        %1802 = vmatprep.subr.mxu0 0.0
        %1803 = vmatpush1.msra.mxu0 0.0
        %1804 = vmatprep.mubr.f32.mxu0 0.0
        %1805 = vmatmul.mubr.f32.gmra.mrb[0].mxu0 %v1658
        %v1806 = vpop.f32.mrb[0].mxu0
        %v1807 = vadd.f32 0.0, %v1806
        %v1808 = vpop.f32.mrb[0].mxu0
        %1809 = vmatprep.mubr.f32.mxu0 0.0
        %1810 = vmatmul.mubr.f32.gmra.mrb[0].mxu0 %v1661
        %v1811 = vpop.f32.mrb[0].mxu0
        %v1812 = vadd.f32 0.0, %v1811
        %v1813 = vpop.f32.mrb[0].mxu0
        %1814 = vdwg.mxu0
        %v1815 = vadd.f32 %v1388, %v1730
        %v1816 = vadd.f32 %v1390, %v1732
        %v1817 = vadd.f32 %v1465, %v1807
        %v1818 = vadd.f32 %v1394, %v1736
        %v1819 = vadd.f32 %v1396, %v1738
        %v1820 = vadd.f32 %v1470, %v1812
        %1821 = vst [vmem:[%s217] sm:$0xff] %v1815
        %1822 = vst [vmem:[%s217 + $0x8] sm:$0xff] %v1816
        %1823 = vst [vmem:[%s217 + $0x10] sm:$0xff] %v1817
        %1824 = vst [vmem:[%s217 + $0x18] sm:$0xff] %v1818
        %1825 = vst [vmem:[%s217 + $0x20] sm:$0xff] %v1819
        %1826 = vst [vmem:[%s217 + $0x28] sm:$0xff] %v1820
        %s1827 = sand.u32 %s131, 1
        %s1828 = scalar_lea.sflag [#allocation4], %s1827
        %s1829 = sand.u32 %s131, 1
        %s1830 = smul.addr %s1829, 48
        %s1831 = scalar_lea.vmem [#allocation3], %s1830
        // Predicated region
        $region37: #{tpu_custom_call.1} parent=35 // pred_check
          %p1832 = pneg %p141
        $region38: #{tpu_custom_call.1} parent=35 // pred_check_branch
          %1834 = sbr.rel (%p1832) target = $region40
        $region39: #{tpu_custom_call.1} parent=35 // pred_region
          %s1836 = ssub.s32 768, 768
          %1837 = vsyncadd %s1828, %s1836
          %s1838 = smul.addr %s23, 6
          %s1839 = smul.addr %s22, 6
          %s1840 = sadd.s32 %s1838, %s1839
          %s1841 = smul.addr %s1840, 128
          %s1842 = scalar_lea.hbm %s4, %s1841
          %s1843 = sshll.u32 %s1831, 4
          %s1844 = int_to_ptr.vmem [resolvable:$true] %s1843
          %1849 = dma.vmem_to_hbm [thread:$0]  %s1844, 768, %s1842, %s1828, 384, 384, 24
        $region40: #{tpu_custom_call.1} parent=35 // pred_fallthru
          _
      $region36: #{tpu_custom_call.1} parent=5 // pred_fallthru
        _
      %p1850 = scmp.le.s32.totalorder 2, %s13
      // Predicated region
      $region41: #{tpu_custom_call.1} parent=5 // pred_check
        %p1851 = pneg %p1850
      $region42: #{tpu_custom_call.1} parent=5 // pred_check_branch
        %1853 = sbr.rel (%p1851) target = $region44
      $region43: #{tpu_custom_call.1} parent=5 // pred_region
        %s1854 = ssub.s32 %s13, 2
        // Predicated region
        $region45: #{tpu_custom_call.1} parent=43 // pred_check
          %p1855 = pneg %p147
        $region46: #{tpu_custom_call.1} parent=43 // pred_check_branch
          %1857 = sbr.rel (%p1855) target = $region48
        $region47: #{tpu_custom_call.1} parent=43 // pred_region
          %s1858 = sand.u32 %s132, 1
          %s1859 = scalar_lea.sflag [#allocation4], %s1858
          %s1860 = sand.u32 %s132, 1
          %s1861 = smul.addr %s1860, 48
          %s1862 = scalar_lea.vmem [#allocation3], %s1861
          %1863 = dma.done %s1859, 768
        $region48: #{tpu_custom_call.1} parent=43 // pred_fallthru
          _
      $region44: #{tpu_custom_call.1} parent=5 // pred_fallthru
        _
    $region6: #{tpu_custom_call.1} parent=1 // loop_footer
      %s17 = sadd.s32 1, %s13
    $region7: #{tpu_custom_call.1} parent=1 // loop_footer_branch
      %12 = sbr.rel target = $region3
    $region8: #{tpu_custom_call.1} parent=1 // loop_exit
      _
    %1864 = vsyncpa [#allocation4], 1
    %s1865 = scalar_lea.sflag [#allocation4], 1
    %1866 = vsyncpa %s1865, 1

</llo_original>
